<compile_context>
chip_gen: v7x
topology: tpu7x:2x2x1
jax: 0.10.0
libtpu: 0.0.40
codegen_flags: <defaults>
</compile_context>

<pallas_src>
import functools

import jax
import jax.numpy as jnp
from jax.experimental import pallas as pl
from jax.experimental.pallas import tpu as pltpu


# ----------------------------------------------------------------------------
# Pallas kernel: one (batch, output-tile) step of 3-D grid_sample (trilinear,
# align_corners=True, zeros padding), fused with the flow -> grid preprocessing.
# ----------------------------------------------------------------------------
def _grid_sample3d_kernel(src_ref, locs_ref, rowx_ref, out_ref, *,
                          src_dims, flow_dims):
    """Refs (leading batch dim squeezed away by the BlockSpecs):
         src_ref  : (C*W, D*H) f32  src permuted so x fuses into the matmul M dim
         locs_ref : (3, TP)    f32  grid + flow in flow-volume voxel units
         rowx_ref : (C*W, 1)   i32  x coordinate of each src row (constant)
         out_ref  : (C, TP)    f32
    """
    D, H, W = src_dims
    Df, Hf, Wf = flow_dims
    CW, DH = src_ref.shape
    C, TP = out_ref.shape

    locs = locs_ref[...]
    # normalize by the flow dims then unnormalize by the src dims
    # (align_corners=True) collapses to one scale per axis.
    iz = locs[0:1, :] * ((D - 1) / (Df - 1))
    iy = locs[1:2, :] * ((H - 1) / (Hf - 1))
    ix = locs[2:3, :] * ((W - 1) / (Wf - 1))

    z0f, y0f, x0f = jnp.floor(iz), jnp.floor(iy), jnp.floor(ix)
    wz1, wy1, wx1 = iz - z0f, iy - y0f, ix - x0f
    wz0, wy0, wx0 = 1.0 - wz1, 1.0 - wy1, 1.0 - wx1
    z0 = z0f.astype(jnp.int32)
    y0 = y0f.astype(jnp.int32)
    x0 = x0f.astype(jnp.int32)

    # Per-axis tap validity (zeros padding outside the src volume), hoisted once.
    vz0 = (z0 >= 0) & (z0 <= D - 1)
    vz1 = (z0 >= -1) & (z0 <= D - 2)
    vy0 = (y0 >= 0) & (y0 <= H - 1)
    vy1 = (y0 >= -1) & (y0 <= H - 2)
    vx0 = (x0 >= 0) & (x0 <= W - 1)
    vx1 = (x0 >= -1) & (x0 <= W - 2)

    # ---- stage 1: (z, y) bilinear as a sparse (D*H, TP) matrix, ONE pass ------
    # Weights are masked BEFORE the iota compare so out-of-bounds corners that
    # alias onto valid flattened indices contribute exactly zero.
    w00 = jnp.where(vz0 & vy0, wz0 * wy0, 0.0)          # (1, TP)
    w01 = jnp.where(vz0 & vy1, wz0 * wy1, 0.0)
    w10 = jnp.where(vz1 & vy0, wz1 * wy0, 0.0)
    w11 = jnp.where(vz1 & vy1, wz1 * wy1, 0.0)
    base_zy = z0 * H + y0                                # (1, TP) int32
    delta = jax.lax.broadcasted_iota(jnp.int32, (DH, TP), 0) - base_zy
    wt_zy = (jnp.where(delta == 0, w00, 0.0)
             + jnp.where(delta == 1, w01, 0.0)
             + jnp.where(delta == H, w10, 0.0)
             + jnp.where(delta == H + 1, w11, 0.0))      # (DH, TP), single store

    # (C*W, D*H) @ (D*H, TP): every x column of every channel, zy-interpolated.
    g = jnp.dot(src_ref[...], wt_zy, preferred_element_type=jnp.float32)  # (CW, TP)

    # ---- stage 2: 2-tap x interpolation + per-channel reduction ---------------
    xrow = rowx_ref[...]                                 # (CW, 1) int32
    wx0m = jnp.where(vx0, wx0, 0.0)                      # (1, TP)
    wx1m = jnp.where(vx1, wx1, 0.0)
    wsel = (jnp.where(xrow == x0, wx0m, 0.0)
            + jnp.where(xrow == x0 + 1, wx1m, 0.0))      # (CW, TP)

    # Channel-sum selection matrix S[c, q] = 1 iff row q belongs to channel c
    # (built from iota compares: no integer div/mod, no reshape of the matmul out).
    ci = jax.lax.broadcasted_iota(jnp.int32, (C, CW), 0)
    qi = jax.lax.broadcasted_iota(jnp.int32, (C, CW), 1)
    sel = ((qi >= ci * W) & (qi < (ci + 1) * W)).astype(jnp.float32)

    out_ref[...] = jnp.dot(sel, g * wsel, preferred_element_type=jnp.float32)


# ----------------------------------------------------------------------------
# Wrapper: pre-permute src, fold the base grid into flow, pad to lane-dense P,
# pick a VMEM-budgeted tile width, launch the fused kernel.
# ----------------------------------------------------------------------------
def spatial_transformer_pallas(src, flow, *, max_tile=2048):
    """3-D SpatialTransformer forward: grid_sample(src, grid + flow), trilinear."""
    B, C, D, H, W = src.shape
    Bf, three, Df, Hf, Wf = flow.shape
    assert Bf == B and three == 3
    DH, CW = D * H, C * W
    P = Df * Hf * Wf
    P_pad = ((P + 127) // 128) * 128          # lane-dense output stores

    # Generation-aware tile width: budget the in-kernel slabs against this chip's
    # VMEM (64 MiB on v7x, 128 MiB on v5e/v6e).
    try:
        vmem_cap = int(pltpu.get_tpu_info().vmem_capacity_bytes)
    except Exception:                          # conservative fallback (v7x size)
        vmem_cap = 64 * 1024 * 1024
    fixed = 2 * 4 * CW * (DH + 1)                          # double-buffered src block
    per_col = 12 * DH + 12 * CW + 8 * C + 128              # ~bytes per output column
    budget_cols = max(128, (int(vmem_cap * 0.6) - fixed) // per_col)
    tp = min(max_tile, budget_cols, P_pad)
    tp = max(128, (tp // 128) * 128)
    if B == 1 and P_pad >= 256:                            # >=2 programs -> both v7x TCs
        tp = min(tp, max(128, (P_pad // 2 // 128) * 128))
    while P_pad % tp:
        tp -= 128
    n_tiles = P_pad // tp

    # src pre-permuted so the x axis fuses into the matmul M dimension:
    #   src_perm[b, c*W + x, z*H + y] = src[b, c, z, y, x]
    src_perm = jnp.transpose(src.astype(jnp.float32),
                             (0, 1, 4, 2, 3)).reshape(B, CW, DH)

    # grid + flow, pre-added in the wrapper (drops the base-grid input stream).
    gd, gh, gw = jnp.meshgrid(jnp.arange(Df, dtype=jnp.float32),
                              jnp.arange(Hf, dtype=jnp.float32),
                              jnp.arange(Wf, dtype=jnp.float32), indexing='ij')
    base = jnp.stack([gd.reshape(-1), gh.reshape(-1), gw.reshape(-1)], axis=0)
    locs = flow.reshape(B, 3, P).astype(jnp.float32) + base[None]
    if P_pad != P:
        locs = jnp.pad(locs, ((0, 0), (0, 0), (0, P_pad - P)))

    row_x = (jnp.arange(CW, dtype=jnp.int32) % W).reshape(CW, 1)

    kernel = functools.partial(_grid_sample3d_kernel,
                               src_dims=(D, H, W), flow_dims=(Df, Hf, Wf))

    # Cost estimate covering the VPU one-hot build, both matmuls and coord math.
    flops = B * (2 * CW * DH * P_pad + 2 * C * CW * P_pad
                 + 14 * DH * P_pad + 10 * CW * P_pad + 64 * P_pad)
    bytes_accessed = 4 * (B * CW * DH + B * 3 * P_pad + B * C * P_pad + CW)

    out_flat = pl.pallas_call(
        kernel,
        out_shape=jax.ShapeDtypeStruct((B, C, P_pad), jnp.float32),
        grid=(B, n_tiles),
        in_specs=[
            pl.BlockSpec((None, CW, DH), lambda b, j: (b, 0, 0)),   # whole src, per batch
            pl.BlockSpec((None, 3, tp), lambda b, j: (b, 0, j)),    # grid+flow tile
            pl.BlockSpec((CW, 1), lambda b, j: (0, 0)),             # x index per src row
        ],
        out_specs=pl.BlockSpec((None, C, tp), lambda b, j: (b, 0, j)),
        compiler_params=pltpu.CompilerParams(
            dimension_semantics=("parallel", "parallel"),
            vmem_limit_bytes=int(vmem_cap * 0.85)),
        cost_estimate=pl.CostEstimate(flops=int(flops), transcendentals=0,
                                      bytes_accessed=int(bytes_accessed)),
    )(src_perm, locs, row_x)

    return out_flat[:, :, :P].reshape(B, C, Df, Hf, Wf)


# ----------------------------------------------------------------------------
# Pure-JAX reference of the same forward pass (for correctness check).
# ----------------------------------------------------------------------------
def spatial_transformer_ref(src, flow):
    B, C, D, H, W = src.shape
    Df, Hf, Wf = flow.shape[2:]
    gd, gh, gw = jnp.meshgrid(jnp.arange(Df, dtype=jnp.float32),
                              jnp.arange(Hf, dtype=jnp.float32),
                              jnp.arange(Wf, dtype=jnp.float32), indexing='ij')
    nd = 2.0 * ((gd[None] + flow[:, 0]) / (Df - 1) - 0.5)
    nh = 2.0 * ((gh[None] + flow[:, 1]) / (Hf - 1) - 0.5)
    nw = 2.0 * ((gw[None] + flow[:, 2]) / (Wf - 1) - 0.5)
    iz = (nd + 1.0) * 0.5 * (D - 1)
    iy = (nh + 1.0) * 0.5 * (H - 1)
    ix = (nw + 1.0) * 0.5 * (W - 1)
    z0, y0, x0 = jnp.floor(iz), jnp.floor(iy), jnp.floor(ix)
    P = Df * Hf * Wf
    src_flat = src.reshape(B, C, D * H * W)
    out = jnp.zeros((B, C, P), jnp.float32)
    for dz in (0, 1):
        zc = z0 + dz
        wz = (iz - z0) if dz else (1.0 - (iz - z0))
        for dy in (0, 1):
            yc = y0 + dy
            wy = (iy - y0) if dy else (1.0 - (iy - y0))
            for dx in (0, 1):
                xc = x0 + dx
                wx = (ix - x0) if dx else (1.0 - (ix - x0))
                valid = ((zc >= 0) & (zc <= D - 1) & (yc >= 0) & (yc <= H - 1)
                         & (xc >= 0) & (xc <= W - 1))
                w = jnp.where(valid, wz * wy * wx, 0.0).reshape(B, 1, P)
                idx = ((jnp.clip(zc, 0, D - 1).astype(jnp.int32) * H
                        + jnp.clip(yc, 0, H - 1).astype(jnp.int32)) * W
                       + jnp.clip(xc, 0, W - 1).astype(jnp.int32)).reshape(B, 1, P)
                vals = jnp.take_along_axis(
                    src_flat, jnp.broadcast_to(idx, (B, C, P)), axis=2)
                out = out + w * vals
    return out.reshape(B, C, Df, Hf, Wf)


if __name__ == "__main__":
    # Non-cubic volume (D != H != W) and P = 480 (not a multiple of 128) to
    # exercise the axis ordering and the padded lane-dense output path.
    B, C, D, H, W = 2, 4, 8, 10, 6

    key = jax.random.PRNGKey(0)
    k_src, k_flow = jax.random.split(key)
    src = jax.random.normal(k_src, (B, C, D, H, W), jnp.float32)
    # displacement field; magnitude ~2 voxels -> exercises interpolation and the
    # zeros-padding (out-of-bounds) path of grid_sample.
    flow = 2.0 * jax.random.normal(k_flow, (B, 3, D, H, W), jnp.float32)

    run = jax.jit(spatial_transformer_pallas)
    out = jax.block_until_ready(run(src, flow))

    ref = spatial_transformer_ref(src, flow)

    assert out.shape == (B, C, D, H, W)
    assert bool(jnp.all(jnp.isfinite(out)))
    assert bool(jnp.allclose(out, ref, rtol=1e-4, atol=1e-4)), "mismatch vs JAX reference"
    print("KERNEL_OK")
</pallas_src>

<mosaic_0001>
module attributes {stable_mosaic.version = 11 : i64} {
  func.func @_grid_sample3d_kernel(%arg0: i32, %arg1: i32, %arg2: memref<1x24x80xf32, #tpu.memory_space<vmem>>, %arg3: memref<1x3x512xf32, #tpu.memory_space<vmem>>, %arg4: memref<24x1xi32, #tpu.memory_space<vmem>>, %arg5: memref<1x4x512xf32, #tpu.memory_space<vmem>>) attributes {dimension_semantics = [#tpu.dimension_semantics<parallel>, #tpu.dimension_semantics<parallel>], iteration_bounds = array<i64: 2, 1>, scalar_prefetch = 0 : i64, scratch_operands = 0 : i64, tpu.core_type = #tpu.core_type<tc>, window_params = [{transform_indices = @transform_0, window_bounds = array<i64: 1, 24, 80>}, {transform_indices = @transform_1, window_bounds = array<i64: 1, 3, 512>}, {pipeline_mode = #tpu.pipeline_mode<synchronous>, transform_indices = @transform_2, window_bounds = array<i64: 24, 1>}, {transform_indices = @transform_3, window_bounds = array<i64: 1, 4, 512>}]} {
    %c0 = arith.constant 0 : index
    %c0_0 = arith.constant 0 : index
    %c0_1 = arith.constant 0 : index
    %0 = vector.load %arg3[%c0, %c0_0, %c0_1] : memref<1x3x512xf32, #tpu.memory_space<vmem>>, vector<1x3x512xf32>
    %1 = vector.shape_cast %0 : vector<1x3x512xf32> to vector<3x512xf32>
    %2 = vector.extract_strided_slice %1 {offsets = [0, 0], sizes = [1, 512], strides = [1, 1]} : vector<3x512xf32> to vector<1x512xf32>
    %cst = arith.constant 1.000000e+00 : f32
    %3 = vector.broadcast %cst : f32 to vector<1x512xf32>
    %4 = arith.mulf %2, %3 : vector<1x512xf32>
    %5 = vector.extract_strided_slice %1 {offsets = [1, 0], sizes = [1, 512], strides = [1, 1]} : vector<3x512xf32> to vector<1x512xf32>
    %cst_2 = arith.constant 1.000000e+00 : f32
    %6 = vector.broadcast %cst_2 : f32 to vector<1x512xf32>
    %7 = arith.mulf %5, %6 : vector<1x512xf32>
    %8 = vector.extract_strided_slice %1 {offsets = [2, 0], sizes = [1, 512], strides = [1, 1]} : vector<3x512xf32> to vector<1x512xf32>
    %cst_3 = arith.constant 1.000000e+00 : f32
    %9 = vector.broadcast %cst_3 : f32 to vector<1x512xf32>
    %10 = arith.mulf %8, %9 : vector<1x512xf32>
    %11 = math.floor %4 : vector<1x512xf32>
    %12 = math.floor %7 : vector<1x512xf32>
    %13 = math.floor %10 : vector<1x512xf32>
    %14 = arith.subf %4, %11 : vector<1x512xf32>
    %15 = arith.subf %7, %12 : vector<1x512xf32>
    %16 = arith.subf %10, %13 : vector<1x512xf32>
    %cst_4 = arith.constant 1.000000e+00 : f32
    %17 = vector.broadcast %cst_4 : f32 to vector<1x512xf32>
    %18 = arith.subf %17, %14 : vector<1x512xf32>
    %cst_5 = arith.constant 1.000000e+00 : f32
    %19 = vector.broadcast %cst_5 : f32 to vector<1x512xf32>
    %20 = arith.subf %19, %15 : vector<1x512xf32>
    %cst_6 = arith.constant 1.000000e+00 : f32
    %21 = vector.broadcast %cst_6 : f32 to vector<1x512xf32>
    %22 = arith.subf %21, %16 : vector<1x512xf32>
    %23 = arith.fptosi %11 : vector<1x512xf32> to vector<1x512xi32>
    %24 = arith.fptosi %12 : vector<1x512xf32> to vector<1x512xi32>
    %25 = arith.fptosi %13 : vector<1x512xf32> to vector<1x512xi32>
    %c0_i32 = arith.constant 0 : i32
    %26 = vector.broadcast %c0_i32 : i32 to vector<1x512xi32>
    %27 = arith.cmpi sge, %23, %26 : vector<1x512xi32>
    %c7_i32 = arith.constant 7 : i32
    %28 = vector.broadcast %c7_i32 : i32 to vector<1x512xi32>
    %29 = arith.cmpi sle, %23, %28 : vector<1x512xi32>
    %30 = arith.andi %27, %29 : vector<1x512xi1>
    %c-1_i32 = arith.constant -1 : i32
    %31 = vector.broadcast %c-1_i32 : i32 to vector<1x512xi32>
    %32 = arith.cmpi sge, %23, %31 : vector<1x512xi32>
    %c6_i32 = arith.constant 6 : i32
    %33 = vector.broadcast %c6_i32 : i32 to vector<1x512xi32>
    %34 = arith.cmpi sle, %23, %33 : vector<1x512xi32>
    %35 = arith.andi %32, %34 : vector<1x512xi1>
    %c0_i32_7 = arith.constant 0 : i32
    %36 = vector.broadcast %c0_i32_7 : i32 to vector<1x512xi32>
    %37 = arith.cmpi sge, %24, %36 : vector<1x512xi32>
    %c9_i32 = arith.constant 9 : i32
    %38 = vector.broadcast %c9_i32 : i32 to vector<1x512xi32>
    %39 = arith.cmpi sle, %24, %38 : vector<1x512xi32>
    %40 = arith.andi %37, %39 : vector<1x512xi1>
    %c-1_i32_8 = arith.constant -1 : i32
    %41 = vector.broadcast %c-1_i32_8 : i32 to vector<1x512xi32>
    %42 = arith.cmpi sge, %24, %41 : vector<1x512xi32>
    %c8_i32 = arith.constant 8 : i32
    %43 = vector.broadcast %c8_i32 : i32 to vector<1x512xi32>
    %44 = arith.cmpi sle, %24, %43 : vector<1x512xi32>
    %45 = arith.andi %42, %44 : vector<1x512xi1>
    %c0_i32_9 = arith.constant 0 : i32
    %46 = vector.broadcast %c0_i32_9 : i32 to vector<1x512xi32>
    %47 = arith.cmpi sge, %25, %46 : vector<1x512xi32>
    %c5_i32 = arith.constant 5 : i32
    %48 = vector.broadcast %c5_i32 : i32 to vector<1x512xi32>
    %49 = arith.cmpi sle, %25, %48 : vector<1x512xi32>
    %50 = arith.andi %47, %49 : vector<1x512xi1>
    %c-1_i32_10 = arith.constant -1 : i32
    %51 = vector.broadcast %c-1_i32_10 : i32 to vector<1x512xi32>
    %52 = arith.cmpi sge, %25, %51 : vector<1x512xi32>
    %c4_i32 = arith.constant 4 : i32
    %53 = vector.broadcast %c4_i32 : i32 to vector<1x512xi32>
    %54 = arith.cmpi sle, %25, %53 : vector<1x512xi32>
    %55 = arith.andi %52, %54 : vector<1x512xi1>
    %56 = arith.andi %30, %40 : vector<1x512xi1>
    %57 = arith.mulf %18, %20 : vector<1x512xf32>
    %cst_11 = arith.constant 0.000000e+00 : f32
    %58 = vector.broadcast %cst_11 : f32 to vector<1x512xf32>
    %59 = arith.select %56, %57, %58 : vector<1x512xi1>, vector<1x512xf32>
    %60 = arith.andi %30, %45 : vector<1x512xi1>
    %61 = arith.mulf %18, %15 : vector<1x512xf32>
    %cst_12 = arith.constant 0.000000e+00 : f32
    %62 = vector.broadcast %cst_12 : f32 to vector<1x512xf32>
    %63 = arith.select %60, %61, %62 : vector<1x512xi1>, vector<1x512xf32>
    %64 = arith.andi %35, %40 : vector<1x512xi1>
    %65 = arith.mulf %14, %20 : vector<1x512xf32>
    %cst_13 = arith.constant 0.000000e+00 : f32
    %66 = vector.broadcast %cst_13 : f32 to vector<1x512xf32>
    %67 = arith.select %64, %65, %66 : vector<1x512xi1>, vector<1x512xf32>
    %68 = arith.andi %35, %45 : vector<1x512xi1>
    %69 = arith.mulf %14, %15 : vector<1x512xf32>
    %cst_14 = arith.constant 0.000000e+00 : f32
    %70 = vector.broadcast %cst_14 : f32 to vector<1x512xf32>
    %71 = arith.select %68, %69, %70 : vector<1x512xi1>, vector<1x512xf32>
    %c10_i32 = arith.constant 10 : i32
    %72 = vector.broadcast %c10_i32 : i32 to vector<1x512xi32>
    %73 = arith.muli %23, %72 : vector<1x512xi32>
    %74 = arith.addi %73, %24 : vector<1x512xi32>
    %75 = tpu.iota {dimensions = array<i32: 0>} : vector<80x512xi32>
    %76 = vector.broadcast %74 : vector<1x512xi32> to vector<80x512xi32>
    %77 = arith.subi %75, %76 : vector<80x512xi32>
    %c0_i32_15 = arith.constant 0 : i32
    %78 = vector.broadcast %c0_i32_15 : i32 to vector<80x512xi32>
    %79 = arith.cmpi eq, %77, %78 : vector<80x512xi32>
    %cst_16 = arith.constant 0.000000e+00 : f32
    %80 = vector.shape_cast %59 : vector<1x512xf32> to vector<1x512xf32>
    %81 = vector.broadcast %80 : vector<1x512xf32> to vector<80x512xf32>
    %82 = vector.broadcast %cst_16 : f32 to vector<80x512xf32>
    %83 = arith.select %79, %81, %82 : vector<80x512xi1>, vector<80x512xf32>
    %c1_i32 = arith.constant 1 : i32
    %84 = vector.broadcast %c1_i32 : i32 to vector<80x512xi32>
    %85 = arith.cmpi eq, %77, %84 : vector<80x512xi32>
    %cst_17 = arith.constant 0.000000e+00 : f32
    %86 = vector.shape_cast %63 : vector<1x512xf32> to vector<1x512xf32>
    %87 = vector.broadcast %86 : vector<1x512xf32> to vector<80x512xf32>
    %88 = vector.broadcast %cst_17 : f32 to vector<80x512xf32>
    %89 = arith.select %85, %87, %88 : vector<80x512xi1>, vector<80x512xf32>
    %90 = arith.addf %83, %89 : vector<80x512xf32>
    %c10_i32_18 = arith.constant 10 : i32
    %91 = vector.broadcast %c10_i32_18 : i32 to vector<80x512xi32>
    %92 = arith.cmpi eq, %77, %91 : vector<80x512xi32>
    %cst_19 = arith.constant 0.000000e+00 : f32
    %93 = vector.shape_cast %67 : vector<1x512xf32> to vector<1x512xf32>
    %94 = vector.broadcast %93 : vector<1x512xf32> to vector<80x512xf32>
    %95 = vector.broadcast %cst_19 : f32 to vector<80x512xf32>
    %96 = arith.select %92, %94, %95 : vector<80x512xi1>, vector<80x512xf32>
    %97 = arith.addf %90, %96 : vector<80x512xf32>
    %c11_i32 = arith.constant 11 : i32
    %98 = vector.broadcast %c11_i32 : i32 to vector<80x512xi32>
    %99 = arith.cmpi eq, %77, %98 : vector<80x512xi32>
    %cst_20 = arith.constant 0.000000e+00 : f32
    %100 = vector.shape_cast %71 : vector<1x512xf32> to vector<1x512xf32>
    %101 = vector.broadcast %100 : vector<1x512xf32> to vector<80x512xf32>
    %102 = vector.broadcast %cst_20 : f32 to vector<80x512xf32>
    %103 = arith.select %99, %101, %102 : vector<80x512xi1>, vector<80x512xf32>
    %104 = arith.addf %97, %103 : vector<80x512xf32>
    %c0_21 = arith.constant 0 : index
    %c0_22 = arith.constant 0 : index
    %c0_23 = arith.constant 0 : index
    %105 = vector.load %arg2[%c0_21, %c0_22, %c0_23] : memref<1x24x80xf32, #tpu.memory_space<vmem>>, vector<1x24x80xf32>
    %106 = vector.shape_cast %105 : vector<1x24x80xf32> to vector<24x80xf32>
    %cst_24 = arith.constant dense<0.000000e+00> : vector<24x512xf32>
    %107 = tpu.matmul %106, %104, %cst_24 {dimension_numbers = #tpu.dot_dimension_numbers<[1], [0], [0], [1], [0, 0, 1, 1], [], []>} : vector<24x80xf32>, vector<80x512xf32>, vector<24x512xf32> -> vector<24x512xf32>
    %c0_25 = arith.constant 0 : index
    %c0_26 = arith.constant 0 : index
    %108 = vector.load %arg4[%c0_25, %c0_26] : memref<24x1xi32, #tpu.memory_space<vmem>>, vector<24x1xi32>
    %cst_27 = arith.constant 0.000000e+00 : f32
    %109 = vector.broadcast %cst_27 : f32 to vector<1x512xf32>
    %110 = arith.select %50, %22, %109 : vector<1x512xi1>, vector<1x512xf32>
    %cst_28 = arith.constant 0.000000e+00 : f32
    %111 = vector.broadcast %cst_28 : f32 to vector<1x512xf32>
    %112 = arith.select %55, %16, %111 : vector<1x512xi1>, vector<1x512xf32>
    %113 = vector.broadcast %108 : vector<24x1xi32> to vector<24x512xi32>
    %114 = vector.broadcast %25 : vector<1x512xi32> to vector<24x512xi32>
    %115 = arith.cmpi eq, %113, %114 : vector<24x512xi32>
    %cst_29 = arith.constant 0.000000e+00 : f32
    %116 = vector.shape_cast %110 : vector<1x512xf32> to vector<1x512xf32>
    %117 = vector.broadcast %116 : vector<1x512xf32> to vector<24x512xf32>
    %118 = vector.broadcast %cst_29 : f32 to vector<24x512xf32>
    %119 = arith.select %115, %117, %118 : vector<24x512xi1>, vector<24x512xf32>
    %c1_i32_30 = arith.constant 1 : i32
    %120 = vector.broadcast %c1_i32_30 : i32 to vector<1x512xi32>
    %121 = arith.addi %25, %120 : vector<1x512xi32>
    %122 = vector.broadcast %108 : vector<24x1xi32> to vector<24x512xi32>
    %123 = vector.broadcast %121 : vector<1x512xi32> to vector<24x512xi32>
    %124 = arith.cmpi eq, %122, %123 : vector<24x512xi32>
    %cst_31 = arith.constant 0.000000e+00 : f32
    %125 = vector.shape_cast %112 : vector<1x512xf32> to vector<1x512xf32>
    %126 = vector.broadcast %125 : vector<1x512xf32> to vector<24x512xf32>
    %127 = vector.broadcast %cst_31 : f32 to vector<24x512xf32>
    %128 = arith.select %124, %126, %127 : vector<24x512xi1>, vector<24x512xf32>
    %129 = arith.addf %119, %128 : vector<24x512xf32>
    %130 = tpu.iota {dimensions = array<i32: 0>} : vector<4x24xi32>
    %131 = tpu.iota {dimensions = array<i32: 1>} : vector<4x24xi32>
    %c6_i32_32 = arith.constant 6 : i32
    %132 = vector.broadcast %c6_i32_32 : i32 to vector<4x24xi32>
    %133 = arith.muli %130, %132 : vector<4x24xi32>
    %134 = arith.cmpi sge, %131, %133 : vector<4x24xi32>
    %c1_i32_33 = arith.constant 1 : i32
    %135 = vector.broadcast %c1_i32_33 : i32 to vector<4x24xi32>
    %136 = arith.addi %130, %135 : vector<4x24xi32>
    %c6_i32_34 = arith.constant 6 : i32
    %137 = vector.broadcast %c6_i32_34 : i32 to vector<4x24xi32>
    %138 = arith.muli %136, %137 : vector<4x24xi32>
    %139 = arith.cmpi slt, %131, %138 : vector<4x24xi32>
    %140 = arith.andi %134, %139 : vector<4x24xi1>
    %141 = arith.extui %140 : vector<4x24xi1> to vector<4x24xi32>
    %142 = arith.sitofp %141 : vector<4x24xi32> to vector<4x24xf32>
    %143 = arith.mulf %107, %129 : vector<24x512xf32>
    %cst_35 = arith.constant dense<0.000000e+00> : vector<4x512xf32>
    %144 = tpu.matmul %142, %143, %cst_35 {dimension_numbers = #tpu.dot_dimension_numbers<[1], [0], [0], [1], [0, 0, 1, 1], [], []>} : vector<4x24xf32>, vector<24x512xf32>, vector<4x512xf32> -> vector<4x512xf32>
    %c0_36 = arith.constant 0 : index
    %c0_37 = arith.constant 0 : index
    %c0_38 = arith.constant 0 : index
    %145 = vector.load %arg5[%c0_36, %c0_37, %c0_38] : memref<1x4x512xf32, #tpu.memory_space<vmem>>, vector<1x4x512xf32>
    %146 = vector.shape_cast %145 : vector<1x4x512xf32> to vector<4x512xf32>
    %147 = vector.shape_cast %144 : vector<4x512xf32> to vector<1x4x512xf32>
    tpu.vector_store %arg5[%c0_36, %c0_37, %c0_38], %147 {strides = array<i32>} : memref<1x4x512xf32, #tpu.memory_space<vmem>>, vector<1x4x512xf32>,
    return
  }
  func.func @transform_0(%arg0: i32, %arg1: i32) -> (i32, i32, i32) {
    %c0_i32 = arith.constant 0 : i32
    %c0_i32_0 = arith.constant 0 : i32
    %c0_i32_1 = arith.constant 0 : i32
    return %arg0, %c0_i32, %c0_i32_0 : i32, i32, i32
  }
  func.func @transform_1(%arg0: i32, %arg1: i32) -> (i32, i32, i32) {
    %c0_i32 = arith.constant 0 : i32
    %c0_i32_0 = arith.constant 0 : i32
    return %arg0, %c0_i32, %arg1 : i32, i32, i32
  }
  func.func @transform_2(%arg0: i32, %arg1: i32) -> (i32, i32) {
    %c0_i32 = arith.constant 0 : i32
    %c0_i32_0 = arith.constant 0 : i32
    %c0_i32_1 = arith.constant 0 : i32
    return %c0_i32, %c0_i32_0 : i32, i32
  }
  func.func @transform_3(%arg0: i32, %arg1: i32) -> (i32, i32, i32) {
    %c0_i32 = arith.constant 0 : i32
    %c0_i32_0 = arith.constant 0 : i32
    return %arg0, %c0_i32, %arg1 : i32, i32, i32
  }
}

</mosaic_0001>

<llo_original>
// kernel: spatial_transformer_pallas.1
$region0: #{spatial_transformer_pallas.1}
  #allocation0 [shape = 'u32[]', space=smem, size = 0x4, offset = 0x4, fixed_abs, tag = 'smem constant byte address 0x4 - core index']
  #allocation1 [shape = 'u32[144,128]{1,0:T(1,128)}', space=vmem, size = 0x12000, scoped, tag = 'internal scratch']
  %s0 = inlined_call_operand.vmem [shape: f32[2,24,80], index: 0, kind: input, shape index: {}]
  %s1 = inlined_call_operand.vmem [shape: f32[2,3,512], index: 1, kind: input, shape index: {}]
  %s2 = inlined_call_operand.vmem [shape: s32[24,1], index: 2, kind: input, shape index: {}]
  %s3 = inlined_call_operand.vmem [shape: f32[2,4,512], index: 3, kind: output, shape index: {}]
  %s4 = sld [smem:[#allocation0]]
  $region45: #{spatial_transformer_pallas.1} parent=0
    _
  %s6 = ssub.s32 1, %s4
  %s7 = scalar_select 0, %s6, %s4
  loop: start=0, step=1, limit=4
  $region2: #{spatial_transformer_pallas.1} parent=0 // loop_pre_header
    _
  $region3: #{spatial_transformer_pallas.1} parent=0 // loop_header
    %s9 = sphi 0, %s13
    %p10 = scmp.ge.s32.totalorder %s9, 4
    %s16 = sphi 0, %s28
    %s17 = sphi 0, %s24
    %s18 = sphi 0, %s16
    %s19 = sphi 0, %s17
    %s20 = sphi 0, %s18
    %s21 = sphi 0, %s19
    %s31 = sphi 0, %s33
    %s34 = sphi 0, %s31
    %s35 = sphi 0, %s34
    %s51 = sphi 0, %s35
    %s59 = sphi 0, %s61
    %s62 = sphi 0, %s59
    %s63 = sphi 0, %s62
    %s79 = sphi 0, %s63
    %s83 = sphi 0, %s83
    %s85 = sphi 0, %s83
    %s86 = sphi 0, %s85
    %s100 = sphi 0, %s86
    %s108 = sphi 0, %s110
    %s111 = sphi 0, %s108
    %s112 = sphi 0, %s111
    %s128 = sphi 0, %s112
  $region4: #{spatial_transformer_pallas.1} parent=0 // loop_header_branch
    %12 = sbr.rel (%p10) target = $region8
  $region5: #{spatial_transformer_pallas.1} parent=0 // loop_body
    %s14 = ssub.s32 %s9, 1
    %s15 = ssub.s32 %s9, 2
    %s22 = sadd.s32 1, %s17
    %p23 = scmp.ge.s32.totalorder %s22, 1
    %s24 = scalar_select %p23, 0, %s22
    %s25 = sadd.s32 1, %s16
    %s26 = scalar_select %p23, %s25, %s16
    %p27 = scmp.ge.s32.totalorder %s26, 2
    %s28 = scalar_select %p27, 0, %s26
    %s29 = ssub.s32 %s16, %s28
    %p30 = scmp.eq.s32.totalorder %s29, 0
    %s32 = sadd.s32 %s31, 1
    %s33 = scalar_select %p30, %s31, %s32
    %p36 = pneg %p30
    %p37 = scmp.eq.s32.totalorder %s9, 1
    %p38 = por %p36, %p37
    %p39 = scmp.ne.s32.totalorder %s31, %s34
    %p40 = scmp.eq.s32.totalorder %s9, 0
    %p41 = por %p39, %p40
    %p42 = scmp.ne.s32.totalorder %s31, %s34
    %p43 = scmp.eq.s32.totalorder %s14, 1
    %p44 = por %p42, %p43
    %p45 = scmp.ne.s32.totalorder %s34, %s35
    %p46 = scmp.eq.s32.totalorder %s14, 0
    %p47 = por %p45, %p46
    %p48 = scmp.ne.s32.totalorder %s34, %s35
    %p49 = scmp.eq.s32.totalorder %s15, 1
    %p50 = por %p48, %p49
    %p52 = scmp.ne.s32.totalorder %s35, %s51
    %p53 = scmp.eq.s32.totalorder %s15, 0
    %p54 = por %p52, %p53
    %s55 = ssub.s32 %s16, %s28
    %s56 = ssub.s32 %s17, %s24
    %s57 = sor.u32 %s55, %s56
    %p58 = scmp.eq.s32.totalorder %s57, 0
    %s60 = sadd.s32 %s59, 1
    %s61 = scalar_select %p58, %s59, %s60
    %p64 = pneg %p58
    %p65 = scmp.eq.s32.totalorder %s9, 1
    %p66 = por %p64, %p65
    %p67 = scmp.ne.s32.totalorder %s59, %s62
    %p68 = scmp.eq.s32.totalorder %s9, 0
    %p69 = por %p67, %p68
    %p70 = scmp.ne.s32.totalorder %s59, %s62
    %p71 = scmp.eq.s32.totalorder %s14, 1
    %p72 = por %p70, %p71
    %p73 = scmp.ne.s32.totalorder %s62, %s63
    %p74 = scmp.eq.s32.totalorder %s14, 0
    %p75 = por %p73, %p74
    %p76 = scmp.ne.s32.totalorder %s62, %s63
    %p77 = scmp.eq.s32.totalorder %s15, 1
    %p78 = por %p76, %p77
    %p80 = scmp.ne.s32.totalorder %s63, %s79
    %p81 = scmp.eq.s32.totalorder %s15, 0
    %p82 = por %p80, %p81
    %s84 = sadd.s32 %s83, 1
    %p87 = scmp.eq.s32.totalorder %s9, 1
    %p88 = scmp.ne.s32.totalorder %s83, %s85
    %p89 = scmp.eq.s32.totalorder %s9, 0
    %p90 = por %p88, %p89
    %p91 = scmp.ne.s32.totalorder %s83, %s85
    %p92 = scmp.eq.s32.totalorder %s14, 1
    %p93 = por %p91, %p92
    %p94 = scmp.ne.s32.totalorder %s85, %s86
    %p95 = scmp.eq.s32.totalorder %s14, 0
    %p96 = por %p94, %p95
    %p97 = scmp.ne.s32.totalorder %s85, %s86
    %p98 = scmp.eq.s32.totalorder %s15, 1
    %p99 = por %p97, %p98
    %p101 = scmp.ne.s32.totalorder %s86, %s100
    %p102 = scmp.eq.s32.totalorder %s15, 0
    %p103 = por %p101, %p102
    %s104 = ssub.s32 %s16, %s28
    %s105 = ssub.s32 %s17, %s24
    %s106 = sor.u32 %s104, %s105
    %p107 = scmp.eq.s32.totalorder %s106, 0
    %s109 = sadd.s32 %s108, 1
    %s110 = scalar_select %p107, %s108, %s109
    %p113 = pneg %p107
    %p114 = scmp.eq.s32.totalorder %s9, 1
    %p115 = por %p113, %p114
    %p116 = scmp.ne.s32.totalorder %s108, %s111
    %p117 = scmp.eq.s32.totalorder %s9, 0
    %p118 = por %p116, %p117
    %p119 = scmp.ne.s32.totalorder %s108, %s111
    %p120 = scmp.eq.s32.totalorder %s14, 1
    %p121 = por %p119, %p120
    %p122 = scmp.ne.s32.totalorder %s111, %s112
    %p123 = scmp.eq.s32.totalorder %s14, 0
    %p124 = por %p122, %p123
    %p125 = scmp.ne.s32.totalorder %s111, %s112
    %p126 = scmp.eq.s32.totalorder %s15, 1
    %p127 = por %p125, %p126
    %p129 = scmp.ne.s32.totalorder %s112, %s128
    %p130 = scmp.eq.s32.totalorder %s15, 0
    %p131 = por %p129, %p130
    %p132 = scmp.le.s32.totalorder 1, %s9
    %p133 = scmp.lt.s32.totalorder %s9, 3
    %p134 = pnand %p132, %p133
    %p135 = pneg %p134
    // Predicated region
    $region9: #{spatial_transformer_pallas.1} parent=5 // pred_check
      _
    $region10: #{spatial_transformer_pallas.1} parent=5 // pred_check_branch
      %137 = sbr.rel (%p134) target = $region12
    $region11: #{spatial_transformer_pallas.1} parent=5 // pred_region
      %s138 = ssub.s32 %s9, 1
      // Predicated region
      $region13: #{spatial_transformer_pallas.1} parent=11 // pred_check
        %p139 = pneg %p96
      $region14: #{spatial_transformer_pallas.1} parent=11 // pred_check_branch
        %141 = sbr.rel (%p139) target = $region16
      $region15: #{spatial_transformer_pallas.1} parent=11 // pred_region
        _
      $region16: #{spatial_transformer_pallas.1} parent=11 // pred_fallthru
        _
    $region12: #{spatial_transformer_pallas.1} parent=5 // pred_fallthru
      _
    %p142 = scmp.lt.s32.totalorder %s9, 2
    // Predicated region
    $region17: #{spatial_transformer_pallas.1} parent=5 // pred_check
      %p143 = pneg %p142
    $region18: #{spatial_transformer_pallas.1} parent=5 // pred_check_branch
      %145 = sbr.rel (%p143) target = $region20
    $region19: #{spatial_transformer_pallas.1} parent=5 // pred_region
      // Predicated region
      $region21: #{spatial_transformer_pallas.1} parent=19 // pred_check
        %p146 = pneg %p41
      $region22: #{spatial_transformer_pallas.1} parent=19 // pred_check_branch
        %148 = sbr.rel (%p146) target = $region24
      $region23: #{spatial_transformer_pallas.1} parent=19 // pred_region
        %p149 = scmp.lt.s32.totalorder %s16, 1
        %s150 = scalar_select %p149, %s16, 1
        %s151 = smul.addr %s150, 3
        %s152 = smul.addr %s151, 8
        %s153 = scalar_lea.vmem %s0, %s152
      $region24: #{spatial_transformer_pallas.1} parent=19 // pred_fallthru
        _
      // Predicated region
      $region25: #{spatial_transformer_pallas.1} parent=19 // pred_check
        %p154 = pneg %p69
      $region26: #{spatial_transformer_pallas.1} parent=19 // pred_check_branch
        %156 = sbr.rel (%p154) target = $region28
      $region27: #{spatial_transformer_pallas.1} parent=19 // pred_region
        %s157 = smul.u32 4, %s17
        %p158 = scmp.lt.s32.totalorder %s16, 1
        %s159 = scalar_select %p158, %s16, 1
        %p160 = scmp.lt.s32.totalorder %s157, 3
        %s161 = scalar_select %p160, %s157, 3
        %s162 = smul.addr %s159, 4
        %s163 = sadd.s32 %s161, %s162
        %s164 = smul.addr %s163, 4
        %s165 = scalar_lea.vmem %s1, %s164
        %s166 = smul.u32 4, %s17
      $region28: #{spatial_transformer_pallas.1} parent=19 // pred_fallthru
        _
    $region20: #{spatial_transformer_pallas.1} parent=5 // pred_fallthru
      _
    %p167 = scmp.le.s32.totalorder 1, %s9
    %p168 = scmp.lt.s32.totalorder %s9, 3
    %p169 = pnand %p167, %p168
    %p170 = pneg %p169
    // Predicated region
    $region29: #{spatial_transformer_pallas.1} parent=5 // pred_check
      _
    $region30: #{spatial_transformer_pallas.1} parent=5 // pred_check_branch
      %172 = sbr.rel (%p169) target = $region32
    $region31: #{spatial_transformer_pallas.1} parent=5 // pred_region
      %s173 = ssub.s32 %s9, 1
      %p174 = scmp.lt.s32.totalorder %s18, 1
      %s175 = scalar_select %p174, %s18, 1
      %s176 = smul.addr %s175, 3
      %s177 = smul.addr %s176, 8
      %s178 = scalar_lea.vmem %s0, %s177
      %p179 = pneg %p47
      %p180 = pneg %p44
      %s181 = smul.u32 4, %s19
      %p182 = scmp.lt.s32.totalorder %s18, 1
      %s183 = scalar_select %p182, %s18, 1
      %p184 = scmp.lt.s32.totalorder %s181, 3
      %s185 = scalar_select %p184, %s181, 3
      %s186 = smul.addr %s183, 4
      %s187 = sadd.s32 %s185, %s186
      %s188 = smul.addr %s187, 4
      %s189 = scalar_lea.vmem %s1, %s188
      %p190 = pneg %p75
      %p191 = pneg %p72
      %p192 = pneg %p96
      %p193 = pneg %p93
      %p194 = pneg %p124
      %p195 = pneg %p121
      %s196 = smul.u32 4, %s19
      %p197 = scmp.lt.s32.totalorder %s18, 1
      %s198 = scalar_select %p197, %s18, 1
      %p199 = scmp.lt.s32.totalorder %s196, 3
      %s200 = scalar_select %p199, %s196, 3
      %s201 = smul.addr %s198, 4
      %s202 = sadd.s32 %s200, %s201
      %s203 = smul.addr %s202, 4
      %s204 = scalar_lea.vmem %s3, %s203
      %p205 = scmp.lt.s32.totalorder %s18, 1
      %s206 = scalar_select %p205, %s18, 1
      %s207 = smul.addr %s206, 3
      %s208 = smul.addr %s207, 8
      %s209 = scalar_lea.vmem %s0, %s208
      %s210 = smul.u32 4, %s19
      %p211 = scmp.lt.s32.totalorder %s18, 1
      %s212 = scalar_select %p211, %s18, 1
      %p213 = scmp.lt.s32.totalorder %s210, 3
      %s214 = scalar_select %p213, %s210, 3
      %s215 = smul.addr %s212, 4
      %s216 = sadd.s32 %s214, %s215
      %s217 = smul.addr %s216, 4
      %s218 = scalar_lea.vmem %s1, %s217
      %s219 = smul.u32 4, %s19
      %s220 = smul.u32 4, %s19
      %p221 = scmp.lt.s32.totalorder %s18, 1
      %s222 = scalar_select %p221, %s18, 1
      %p223 = scmp.lt.s32.totalorder %s220, 3
      %s224 = scalar_select %p223, %s220, 3
      %s225 = smul.addr %s222, 4
      %s226 = sadd.s32 %s224, %s225
      %s227 = smul.addr %s226, 4
      %s228 = scalar_lea.vmem %s3, %s227
      %s229 = smul.u32 4, %s19
      %v230 = vld [vmem:[%s218] sm:$0x77]
      %v231 = vld [vmem:[%s218 + $0x8] sm:$0x77]
      %v232 = vfloor.f32 %v230
      %v233 = vfloor.f32 %v231
      %v234 = vsub.f32 %v230, %v232
      %v235 = vsub.f32 %v231, %v233
      %v236 = vsub.f32 1.0, %v234
      %v237 = vsub.f32 1.0, %v235
      %v238 = vcvt.f32.s32.to.zero.pseudo %v232
      %v239 = vcvt.f32.s32.to.zero.pseudo %v233
      %vm240 = vcmp.ge.s32.totalorder %v238, 0
      %vm241 = vcmp.ge.s32.totalorder %v239, 0
      %vm242 = vcmp.le.s32.totalorder %v238, 7
      %vm243 = vcmp.le.s32.totalorder %v239, 7
      %vm244 = vmand %vm240, %vm242
      %vm245 = vmand %vm241, %vm243
      %vm246 = vcmp.ge.s32.totalorder %v238, 4294967295
      %vm247 = vcmp.ge.s32.totalorder %v239, 4294967295
      %vm248 = vcmp.le.s32.totalorder %v238, 6
      %vm249 = vcmp.le.s32.totalorder %v239, 6
      %vm250 = vmand %vm246, %vm248
      %vm251 = vmand %vm247, %vm249
      %vm252 = vcmp.le.s32.totalorder %v238, 9
      %vm253 = vcmp.le.s32.totalorder %v239, 9
      %vm254 = vmand %vm240, %vm252
      %vm255 = vmand %vm241, %vm253
      %vm256 = vcmp.le.s32.totalorder %v238, 8
      %vm257 = vcmp.le.s32.totalorder %v239, 8
      %vm258 = vmand %vm246, %vm256
      %vm259 = vmand %vm247, %vm257
      %vm260 = vcmp.le.s32.totalorder %v238, 5
      %vm261 = vcmp.le.s32.totalorder %v239, 5
      %vm262 = vmand %vm240, %vm260
      %vm263 = vmand %vm241, %vm261
      %vm264 = vcmp.le.s32.totalorder %v238, 4
      %vm265 = vcmp.le.s32.totalorder %v239, 4
      %vm266 = vmand %vm246, %vm264
      %vm267 = vmand %vm247, %vm265
      %v268 = vsel %vm254, 1, 0
      %v269 = vsel %vm255, 1, 0
      %v270 = vrot.slane %v268, 5
      %v271 = vrot.slane %v270, 4
      %v272 = vrot.slane %v269, 5
      %v273 = vrot.slane %v272, 4
      %vm274 = vcmp.ne.s32.totalorder %v271, 0
      %vm275 = vcmp.ne.s32.totalorder %v273, 0
      %vm276 = vmand %vm244, %vm274
      %vm277 = vmand %vm245, %vm275
      %v280 = vrot.slane %v236, 5
      %v281 = vrot.slane %v280, 4
      %v282 = vrot.slane %v237, 5
      %v283 = vrot.slane %v282, 4
      %v286 = vmul.f32 %v236, %v281
      %v287 = vmul.f32 %v237, %v283
      %v288 = vsel %vm276, %v286, 0.0
      %v289 = vsel %vm277, %v287, 0.0
      %v290 = vsel %vm258, 1, 0
      %v291 = vsel %vm259, 1, 0
      %v292 = vrot.slane %v290, 5
      %v293 = vrot.slane %v292, 4
      %v294 = vrot.slane %v291, 5
      %v295 = vrot.slane %v294, 4
      %vm296 = vcmp.ne.s32.totalorder %v293, 0
      %vm297 = vcmp.ne.s32.totalorder %v295, 0
      %vm298 = vmand %vm244, %vm296
      %vm299 = vmand %vm245, %vm297
      %v302 = vrot.slane %v234, 5
      %v303 = vrot.slane %v302, 4
      %v304 = vrot.slane %v235, 5
      %v305 = vrot.slane %v304, 4
      %v308 = vmul.f32 %v236, %v303
      %v309 = vmul.f32 %v237, %v305
      %v310 = vsel %vm298, %v308, 0.0
      %v311 = vsel %vm299, %v309, 0.0
      %vm312 = vmand %vm250, %vm274
      %vm313 = vmand %vm251, %vm275
      %v314 = vmul.f32 %v234, %v281
      %v315 = vmul.f32 %v235, %v283
      %v316 = vsel %vm312, %v314, 0.0
      %v317 = vsel %vm313, %v315, 0.0
      %vm318 = vmand %vm250, %vm296
      %vm319 = vmand %vm251, %vm297
      %v320 = vmul.f32 %v234, %v303
      %v321 = vmul.f32 %v235, %v305
      %v322 = vsel %vm318, %v320, 0.0
      %v323 = vsel %vm319, %v321, 0.0
      %v324 = vmul.u32 %v238, 10
      %v325 = vmul.u32 %v239, 10
      %v326 = vrot.slane %v238, 5
      %v327 = vrot.slane %v326, 4
      %v328 = vrot.slane %v239, 5
      %v329 = vrot.slane %v328, 4
      %v330 = vadd.s32 %v324, %v327
      %v331 = vadd.s32 %v325, %v329
      %v332 = vlaneseq
      %v333 = vshrl.u32 %v332, 7
      %v334 = vadd.s32 %v333, 8
      %v335 = vadd.s32 %v333, 16
      %v336 = vadd.s32 %v333, 24
      %v337 = vadd.s32 %v333, 32
      %v338 = vadd.s32 %v333, 40
      %v339 = vadd.s32 %v333, 48
      %v340 = vadd.s32 %v333, 56
      %v341 = vadd.s32 %v333, 64
      %v342 = vadd.s32 %v333, 72
      %v343 = vlaneseq
      %v344 = vshrl.u32 %v343, 7
      %v345 = vsub.s32 0, %v344
      %v346 = vrot.slane %v330, %v345
      %v347 = vlaneseq
      %v348 = vshrl.u32 %v347, 7
      %v349 = vsub.s32 4, %v348
      %v350 = vrot.slane %v330, %v349
      %v351 = vlaneseq
      %v352 = vshrl.u32 %v351, 7
      %v353 = vsub.s32 0, %v352
      %v354 = vrot.slane %v331, %v353
      %v355 = vlaneseq
      %v356 = vshrl.u32 %v355, 7
      %v357 = vsub.s32 4, %v356
      %v358 = vrot.slane %v331, %v357
      %v359 = vlaneseq
      %v360 = vshrl.u32 %v359, 7
      %v361 = vsub.s32 0, %v360
      %v362 = vrot.slane %v346, %v361
      %v363 = vlaneseq
      %v364 = vshrl.u32 %v363, 7
      %v365 = vsub.s32 0, %v364
      %v366 = vrot.slane %v350, %v365
      %v367 = vlaneseq
      %v368 = vshrl.u32 %v367, 7
      %v369 = vsub.s32 0, %v368
      %v370 = vrot.slane %v354, %v369
      %v371 = vlaneseq
      %v372 = vshrl.u32 %v371, 7
      %v373 = vsub.s32 0, %v372
      %v374 = vrot.slane %v358, %v373
      %v375 = vsub.s32 %v333, %v362
      %v376 = vsub.s32 %v333, %v366
      %v377 = vsub.s32 %v333, %v370
      %v378 = vsub.s32 %v333, %v374
      %v379 = vsub.s32 %v334, %v362
      %v380 = vsub.s32 %v334, %v366
      %v381 = vsub.s32 %v334, %v370
      %v382 = vsub.s32 %v334, %v374
      %v383 = vsub.s32 %v335, %v362
      %v384 = vsub.s32 %v335, %v366
      %v385 = vsub.s32 %v335, %v370
      %v386 = vsub.s32 %v335, %v374
      %v387 = vsub.s32 %v336, %v362
      %v388 = vsub.s32 %v336, %v366
      %v389 = vsub.s32 %v336, %v370
      %v390 = vsub.s32 %v336, %v374
      %v391 = vsub.s32 %v337, %v362
      %v392 = vsub.s32 %v337, %v366
      %v393 = vsub.s32 %v337, %v370
      %v394 = vsub.s32 %v337, %v374
      %v395 = vsub.s32 %v338, %v362
      %v396 = vsub.s32 %v338, %v366
      %v397 = vsub.s32 %v338, %v370
      %v398 = vsub.s32 %v338, %v374
      %v399 = vsub.s32 %v339, %v362
      %v400 = vsub.s32 %v339, %v366
      %v401 = vsub.s32 %v339, %v370
      %v402 = vsub.s32 %v339, %v374
      %v403 = vsub.s32 %v340, %v362
      %v404 = vsub.s32 %v340, %v366
      %v405 = vsub.s32 %v340, %v370
      %v406 = vsub.s32 %v340, %v374
      %v407 = vsub.s32 %v341, %v362
      %v408 = vsub.s32 %v341, %v366
      %v409 = vsub.s32 %v341, %v370
      %v410 = vsub.s32 %v341, %v374
      %v411 = vsub.s32 %v342, %v362
      %v412 = vsub.s32 %v342, %v366
      %v413 = vsub.s32 %v342, %v370
      %v414 = vsub.s32 %v342, %v374
      %vm415 = vcmp.eq.s32.totalorder %v375, 0
      %vm416 = vcmp.eq.s32.totalorder %v376, 0
      %vm417 = vcmp.eq.s32.totalorder %v377, 0
      %vm418 = vcmp.eq.s32.totalorder %v378, 0
      %vm419 = vcmp.eq.s32.totalorder %v379, 0
      %vm420 = vcmp.eq.s32.totalorder %v380, 0
      %vm421 = vcmp.eq.s32.totalorder %v381, 0
      %vm422 = vcmp.eq.s32.totalorder %v382, 0
      %vm423 = vcmp.eq.s32.totalorder %v383, 0
      %vm424 = vcmp.eq.s32.totalorder %v384, 0
      %vm425 = vcmp.eq.s32.totalorder %v385, 0
      %vm426 = vcmp.eq.s32.totalorder %v386, 0
      %vm427 = vcmp.eq.s32.totalorder %v387, 0
      %vm428 = vcmp.eq.s32.totalorder %v388, 0
      %vm429 = vcmp.eq.s32.totalorder %v389, 0
      %vm430 = vcmp.eq.s32.totalorder %v390, 0
      %vm431 = vcmp.eq.s32.totalorder %v391, 0
      %vm432 = vcmp.eq.s32.totalorder %v392, 0
      %vm433 = vcmp.eq.s32.totalorder %v393, 0
      %vm434 = vcmp.eq.s32.totalorder %v394, 0
      %vm435 = vcmp.eq.s32.totalorder %v395, 0
      %vm436 = vcmp.eq.s32.totalorder %v396, 0
      %vm437 = vcmp.eq.s32.totalorder %v397, 0
      %vm438 = vcmp.eq.s32.totalorder %v398, 0
      %vm439 = vcmp.eq.s32.totalorder %v399, 0
      %vm440 = vcmp.eq.s32.totalorder %v400, 0
      %vm441 = vcmp.eq.s32.totalorder %v401, 0
      %vm442 = vcmp.eq.s32.totalorder %v402, 0
      %vm443 = vcmp.eq.s32.totalorder %v403, 0
      %vm444 = vcmp.eq.s32.totalorder %v404, 0
      %vm445 = vcmp.eq.s32.totalorder %v405, 0
      %vm446 = vcmp.eq.s32.totalorder %v406, 0
      %vm447 = vcmp.eq.s32.totalorder %v407, 0
      %vm448 = vcmp.eq.s32.totalorder %v408, 0
      %vm449 = vcmp.eq.s32.totalorder %v409, 0
      %vm450 = vcmp.eq.s32.totalorder %v410, 0
      %vm451 = vcmp.eq.s32.totalorder %v411, 0
      %vm452 = vcmp.eq.s32.totalorder %v412, 0
      %vm453 = vcmp.eq.s32.totalorder %v413, 0
      %vm454 = vcmp.eq.s32.totalorder %v414, 0
      %v457 = vlaneseq
      %v458 = vshrl.u32 %v457, 7
      %v459 = vsub.s32 0, %v458
      %v460 = vrot.slane %v288, %v459
      %v461 = vlaneseq
      %v462 = vshrl.u32 %v461, 7
      %v463 = vsub.s32 4, %v462
      %v464 = vrot.slane %v288, %v463
      %v465 = vlaneseq
      %v466 = vshrl.u32 %v465, 7
      %v467 = vsub.s32 0, %v466
      %v468 = vrot.slane %v289, %v467
      %v469 = vlaneseq
      %v470 = vshrl.u32 %v469, 7
      %v471 = vsub.s32 4, %v470
      %v472 = vrot.slane %v289, %v471
      %v477 = vlaneseq
      %v478 = vshrl.u32 %v477, 7
      %v479 = vsub.s32 0, %v478
      %v480 = vrot.slane %v460, %v479
      %v481 = vlaneseq
      %v482 = vshrl.u32 %v481, 7
      %v483 = vsub.s32 0, %v482
      %v484 = vrot.slane %v464, %v483
      %v485 = vlaneseq
      %v486 = vshrl.u32 %v485, 7
      %v487 = vsub.s32 0, %v486
      %v488 = vrot.slane %v468, %v487
      %v489 = vlaneseq
      %v490 = vshrl.u32 %v489, 7
      %v491 = vsub.s32 0, %v490
      %v492 = vrot.slane %v472, %v491
      %v493 = vsel %vm415, %v480, 0.0
      %v494 = vsel %vm416, %v484, 0.0
      %v495 = vsel %vm417, %v488, 0.0
      %v496 = vsel %vm418, %v492, 0.0
      %v497 = vsel %vm419, %v480, 0.0
      %v498 = vsel %vm420, %v484, 0.0
      %v499 = vsel %vm421, %v488, 0.0
      %v500 = vsel %vm422, %v492, 0.0
      %v501 = vsel %vm423, %v480, 0.0
      %v502 = vsel %vm424, %v484, 0.0
      %v503 = vsel %vm425, %v488, 0.0
      %v504 = vsel %vm426, %v492, 0.0
      %v505 = vsel %vm427, %v480, 0.0
      %v506 = vsel %vm428, %v484, 0.0
      %v507 = vsel %vm429, %v488, 0.0
      %v508 = vsel %vm430, %v492, 0.0
      %v509 = vsel %vm431, %v480, 0.0
      %v510 = vsel %vm432, %v484, 0.0
      %v511 = vsel %vm433, %v488, 0.0
      %v512 = vsel %vm434, %v492, 0.0
      %v513 = vsel %vm435, %v480, 0.0
      %v514 = vsel %vm436, %v484, 0.0
      %v515 = vsel %vm437, %v488, 0.0
      %v516 = vsel %vm438, %v492, 0.0
      %v517 = vsel %vm439, %v480, 0.0
      %v518 = vsel %vm440, %v484, 0.0
      %v519 = vsel %vm441, %v488, 0.0
      %v520 = vsel %vm442, %v492, 0.0
      %v521 = vsel %vm443, %v480, 0.0
      %v522 = vsel %vm444, %v484, 0.0
      %v523 = vsel %vm445, %v488, 0.0
      %v524 = vsel %vm446, %v492, 0.0
      %v525 = vsel %vm447, %v480, 0.0
      %v526 = vsel %vm448, %v484, 0.0
      %v527 = vsel %vm449, %v488, 0.0
      %v528 = vsel %vm450, %v492, 0.0
      %v529 = vsel %vm451, %v480, 0.0
      %v530 = vsel %vm452, %v484, 0.0
      %v531 = vsel %vm453, %v488, 0.0
      %v532 = vsel %vm454, %v492, 0.0
      %vm533 = vcmp.eq.s32.totalorder %v375, 1
      %vm534 = vcmp.eq.s32.totalorder %v376, 1
      %vm535 = vcmp.eq.s32.totalorder %v377, 1
      %vm536 = vcmp.eq.s32.totalorder %v378, 1
      %vm537 = vcmp.eq.s32.totalorder %v379, 1
      %vm538 = vcmp.eq.s32.totalorder %v380, 1
      %vm539 = vcmp.eq.s32.totalorder %v381, 1
      %vm540 = vcmp.eq.s32.totalorder %v382, 1
      %vm541 = vcmp.eq.s32.totalorder %v383, 1
      %vm542 = vcmp.eq.s32.totalorder %v384, 1
      %vm543 = vcmp.eq.s32.totalorder %v385, 1
      %vm544 = vcmp.eq.s32.totalorder %v386, 1
      %vm545 = vcmp.eq.s32.totalorder %v387, 1
      %vm546 = vcmp.eq.s32.totalorder %v388, 1
      %vm547 = vcmp.eq.s32.totalorder %v389, 1
      %vm548 = vcmp.eq.s32.totalorder %v390, 1
      %vm549 = vcmp.eq.s32.totalorder %v391, 1
      %vm550 = vcmp.eq.s32.totalorder %v392, 1
      %vm551 = vcmp.eq.s32.totalorder %v393, 1
      %vm552 = vcmp.eq.s32.totalorder %v394, 1
      %vm553 = vcmp.eq.s32.totalorder %v395, 1
      %vm554 = vcmp.eq.s32.totalorder %v396, 1
      %vm555 = vcmp.eq.s32.totalorder %v397, 1
      %vm556 = vcmp.eq.s32.totalorder %v398, 1
      %vm557 = vcmp.eq.s32.totalorder %v399, 1
      %vm558 = vcmp.eq.s32.totalorder %v400, 1
      %vm559 = vcmp.eq.s32.totalorder %v401, 1
      %vm560 = vcmp.eq.s32.totalorder %v402, 1
      %vm561 = vcmp.eq.s32.totalorder %v403, 1
      %vm562 = vcmp.eq.s32.totalorder %v404, 1
      %vm563 = vcmp.eq.s32.totalorder %v405, 1
      %vm564 = vcmp.eq.s32.totalorder %v406, 1
      %vm565 = vcmp.eq.s32.totalorder %v407, 1
      %vm566 = vcmp.eq.s32.totalorder %v408, 1
      %vm567 = vcmp.eq.s32.totalorder %v409, 1
      %vm568 = vcmp.eq.s32.totalorder %v410, 1
      %vm569 = vcmp.eq.s32.totalorder %v411, 1
      %vm570 = vcmp.eq.s32.totalorder %v412, 1
      %vm571 = vcmp.eq.s32.totalorder %v413, 1
      %vm572 = vcmp.eq.s32.totalorder %v414, 1
      %v575 = vlaneseq
      %v576 = vshrl.u32 %v575, 7
      %v577 = vsub.s32 0, %v576
      %v578 = vrot.slane %v310, %v577
      %v579 = vlaneseq
      %v580 = vshrl.u32 %v579, 7
      %v581 = vsub.s32 4, %v580
      %v582 = vrot.slane %v310, %v581
      %v583 = vlaneseq
      %v584 = vshrl.u32 %v583, 7
      %v585 = vsub.s32 0, %v584
      %v586 = vrot.slane %v311, %v585
      %v587 = vlaneseq
      %v588 = vshrl.u32 %v587, 7
      %v589 = vsub.s32 4, %v588
      %v590 = vrot.slane %v311, %v589
      %v595 = vlaneseq
      %v596 = vshrl.u32 %v595, 7
      %v597 = vsub.s32 0, %v596
      %v598 = vrot.slane %v578, %v597
      %v599 = vlaneseq
      %v600 = vshrl.u32 %v599, 7
      %v601 = vsub.s32 0, %v600
      %v602 = vrot.slane %v582, %v601
      %v603 = vlaneseq
      %v604 = vshrl.u32 %v603, 7
      %v605 = vsub.s32 0, %v604
      %v606 = vrot.slane %v586, %v605
      %v607 = vlaneseq
      %v608 = vshrl.u32 %v607, 7
      %v609 = vsub.s32 0, %v608
      %v610 = vrot.slane %v590, %v609
      %v611 = vsel %vm533, %v598, 0.0
      %v612 = vsel %vm534, %v602, 0.0
      %v613 = vsel %vm535, %v606, 0.0
      %v614 = vsel %vm536, %v610, 0.0
      %v615 = vsel %vm537, %v598, 0.0
      %v616 = vsel %vm538, %v602, 0.0
      %v617 = vsel %vm539, %v606, 0.0
      %v618 = vsel %vm540, %v610, 0.0
      %v619 = vsel %vm541, %v598, 0.0
      %v620 = vsel %vm542, %v602, 0.0
      %v621 = vsel %vm543, %v606, 0.0
      %v622 = vsel %vm544, %v610, 0.0
      %v623 = vsel %vm545, %v598, 0.0
      %v624 = vsel %vm546, %v602, 0.0
      %v625 = vsel %vm547, %v606, 0.0
      %v626 = vsel %vm548, %v610, 0.0
      %v627 = vsel %vm549, %v598, 0.0
      %v628 = vsel %vm550, %v602, 0.0
      %v629 = vsel %vm551, %v606, 0.0
      %v630 = vsel %vm552, %v610, 0.0
      %v631 = vsel %vm553, %v598, 0.0
      %v632 = vsel %vm554, %v602, 0.0
      %v633 = vsel %vm555, %v606, 0.0
      %v634 = vsel %vm556, %v610, 0.0
      %v635 = vsel %vm557, %v598, 0.0
      %v636 = vsel %vm558, %v602, 0.0
      %v637 = vsel %vm559, %v606, 0.0
      %v638 = vsel %vm560, %v610, 0.0
      %v639 = vsel %vm561, %v598, 0.0
      %v640 = vsel %vm562, %v602, 0.0
      %v641 = vsel %vm563, %v606, 0.0
      %v642 = vsel %vm564, %v610, 0.0
      %v643 = vsel %vm565, %v598, 0.0
      %v644 = vsel %vm566, %v602, 0.0
      %v645 = vsel %vm567, %v606, 0.0
      %v646 = vsel %vm568, %v610, 0.0
      %v647 = vsel %vm569, %v598, 0.0
      %v648 = vsel %vm570, %v602, 0.0
      %v649 = vsel %vm571, %v606, 0.0
      %v650 = vsel %vm572, %v610, 0.0
      %v651 = vadd.f32 %v493, %v611
      %v652 = vadd.f32 %v494, %v612
      %v653 = vadd.f32 %v495, %v613
      %v654 = vadd.f32 %v496, %v614
      %v655 = vadd.f32 %v497, %v615
      %v656 = vadd.f32 %v498, %v616
      %v657 = vadd.f32 %v499, %v617
      %v658 = vadd.f32 %v500, %v618
      %v659 = vadd.f32 %v501, %v619
      %v660 = vadd.f32 %v502, %v620
      %v661 = vadd.f32 %v503, %v621
      %v662 = vadd.f32 %v504, %v622
      %v663 = vadd.f32 %v505, %v623
      %v664 = vadd.f32 %v506, %v624
      %v665 = vadd.f32 %v507, %v625
      %v666 = vadd.f32 %v508, %v626
      %v667 = vadd.f32 %v509, %v627
      %v668 = vadd.f32 %v510, %v628
      %v669 = vadd.f32 %v511, %v629
      %v670 = vadd.f32 %v512, %v630
      %v671 = vadd.f32 %v513, %v631
      %v672 = vadd.f32 %v514, %v632
      %v673 = vadd.f32 %v515, %v633
      %v674 = vadd.f32 %v516, %v634
      %v675 = vadd.f32 %v517, %v635
      %v676 = vadd.f32 %v518, %v636
      %v677 = vadd.f32 %v519, %v637
      %v678 = vadd.f32 %v520, %v638
      %v679 = vadd.f32 %v521, %v639
      %v680 = vadd.f32 %v522, %v640
      %v681 = vadd.f32 %v523, %v641
      %v682 = vadd.f32 %v524, %v642
      %v683 = vadd.f32 %v525, %v643
      %v684 = vadd.f32 %v526, %v644
      %v685 = vadd.f32 %v527, %v645
      %v686 = vadd.f32 %v528, %v646
      %v687 = vadd.f32 %v529, %v647
      %v688 = vadd.f32 %v530, %v648
      %v689 = vadd.f32 %v531, %v649
      %v690 = vadd.f32 %v532, %v650
      %vm691 = vcmp.eq.s32.totalorder %v375, 10
      %vm692 = vcmp.eq.s32.totalorder %v376, 10
      %vm693 = vcmp.eq.s32.totalorder %v377, 10
      %vm694 = vcmp.eq.s32.totalorder %v378, 10
      %vm695 = vcmp.eq.s32.totalorder %v379, 10
      %vm696 = vcmp.eq.s32.totalorder %v380, 10
      %vm697 = vcmp.eq.s32.totalorder %v381, 10
      %vm698 = vcmp.eq.s32.totalorder %v382, 10
      %vm699 = vcmp.eq.s32.totalorder %v383, 10
      %vm700 = vcmp.eq.s32.totalorder %v384, 10
      %vm701 = vcmp.eq.s32.totalorder %v385, 10
      %vm702 = vcmp.eq.s32.totalorder %v386, 10
      %vm703 = vcmp.eq.s32.totalorder %v387, 10
      %vm704 = vcmp.eq.s32.totalorder %v388, 10
      %vm705 = vcmp.eq.s32.totalorder %v389, 10
      %vm706 = vcmp.eq.s32.totalorder %v390, 10
      %vm707 = vcmp.eq.s32.totalorder %v391, 10
      %vm708 = vcmp.eq.s32.totalorder %v392, 10
      %vm709 = vcmp.eq.s32.totalorder %v393, 10
      %vm710 = vcmp.eq.s32.totalorder %v394, 10
      %vm711 = vcmp.eq.s32.totalorder %v395, 10
      %vm712 = vcmp.eq.s32.totalorder %v396, 10
      %vm713 = vcmp.eq.s32.totalorder %v397, 10
      %vm714 = vcmp.eq.s32.totalorder %v398, 10
      %vm715 = vcmp.eq.s32.totalorder %v399, 10
      %vm716 = vcmp.eq.s32.totalorder %v400, 10
      %vm717 = vcmp.eq.s32.totalorder %v401, 10
      %vm718 = vcmp.eq.s32.totalorder %v402, 10
      %vm719 = vcmp.eq.s32.totalorder %v403, 10
      %vm720 = vcmp.eq.s32.totalorder %v404, 10
      %vm721 = vcmp.eq.s32.totalorder %v405, 10
      %vm722 = vcmp.eq.s32.totalorder %v406, 10
      %vm723 = vcmp.eq.s32.totalorder %v407, 10
      %vm724 = vcmp.eq.s32.totalorder %v408, 10
      %vm725 = vcmp.eq.s32.totalorder %v409, 10
      %vm726 = vcmp.eq.s32.totalorder %v410, 10
      %vm727 = vcmp.eq.s32.totalorder %v411, 10
      %vm728 = vcmp.eq.s32.totalorder %v412, 10
      %vm729 = vcmp.eq.s32.totalorder %v413, 10
      %vm730 = vcmp.eq.s32.totalorder %v414, 10
      %v733 = vlaneseq
      %v734 = vshrl.u32 %v733, 7
      %v735 = vsub.s32 0, %v734
      %v736 = vrot.slane %v316, %v735
      %v737 = vlaneseq
      %v738 = vshrl.u32 %v737, 7
      %v739 = vsub.s32 4, %v738
      %v740 = vrot.slane %v316, %v739
      %v741 = vlaneseq
      %v742 = vshrl.u32 %v741, 7
      %v743 = vsub.s32 0, %v742
      %v744 = vrot.slane %v317, %v743
      %v745 = vlaneseq
      %v746 = vshrl.u32 %v745, 7
      %v747 = vsub.s32 4, %v746
      %v748 = vrot.slane %v317, %v747
      %v753 = vlaneseq
      %v754 = vshrl.u32 %v753, 7
      %v755 = vsub.s32 0, %v754
      %v756 = vrot.slane %v736, %v755
      %v757 = vlaneseq
      %v758 = vshrl.u32 %v757, 7
      %v759 = vsub.s32 0, %v758
      %v760 = vrot.slane %v740, %v759
      %v761 = vlaneseq
      %v762 = vshrl.u32 %v761, 7
      %v763 = vsub.s32 0, %v762
      %v764 = vrot.slane %v744, %v763
      %v765 = vlaneseq
      %v766 = vshrl.u32 %v765, 7
      %v767 = vsub.s32 0, %v766
      %v768 = vrot.slane %v748, %v767
      %v769 = vsel %vm691, %v756, 0.0
      %v770 = vsel %vm692, %v760, 0.0
      %v771 = vsel %vm693, %v764, 0.0
      %v772 = vsel %vm694, %v768, 0.0
      %v773 = vsel %vm695, %v756, 0.0
      %v774 = vsel %vm696, %v760, 0.0
      %v775 = vsel %vm697, %v764, 0.0
      %v776 = vsel %vm698, %v768, 0.0
      %v777 = vsel %vm699, %v756, 0.0
      %v778 = vsel %vm700, %v760, 0.0
      %v779 = vsel %vm701, %v764, 0.0
      %v780 = vsel %vm702, %v768, 0.0
      %v781 = vsel %vm703, %v756, 0.0
      %v782 = vsel %vm704, %v760, 0.0
      %v783 = vsel %vm705, %v764, 0.0
      %v784 = vsel %vm706, %v768, 0.0
      %v785 = vsel %vm707, %v756, 0.0
      %v786 = vsel %vm708, %v760, 0.0
      %v787 = vsel %vm709, %v764, 0.0
      %v788 = vsel %vm710, %v768, 0.0
      %v789 = vsel %vm711, %v756, 0.0
      %v790 = vsel %vm712, %v760, 0.0
      %v791 = vsel %vm713, %v764, 0.0
      %v792 = vsel %vm714, %v768, 0.0
      %v793 = vsel %vm715, %v756, 0.0
      %v794 = vsel %vm716, %v760, 0.0
      %v795 = vsel %vm717, %v764, 0.0
      %v796 = vsel %vm718, %v768, 0.0
      %v797 = vsel %vm719, %v756, 0.0
      %v798 = vsel %vm720, %v760, 0.0
      %v799 = vsel %vm721, %v764, 0.0
      %v800 = vsel %vm722, %v768, 0.0
      %v801 = vsel %vm723, %v756, 0.0
      %v802 = vsel %vm724, %v760, 0.0
      %v803 = vsel %vm725, %v764, 0.0
      %v804 = vsel %vm726, %v768, 0.0
      %v805 = vsel %vm727, %v756, 0.0
      %v806 = vsel %vm728, %v760, 0.0
      %v807 = vsel %vm729, %v764, 0.0
      %v808 = vsel %vm730, %v768, 0.0
      %v809 = vadd.f32 %v651, %v769
      %v810 = vadd.f32 %v652, %v770
      %v811 = vadd.f32 %v653, %v771
      %v812 = vadd.f32 %v654, %v772
      %v813 = vadd.f32 %v655, %v773
      %v814 = vadd.f32 %v656, %v774
      %v815 = vadd.f32 %v657, %v775
      %v816 = vadd.f32 %v658, %v776
      %v817 = vadd.f32 %v659, %v777
      %v818 = vadd.f32 %v660, %v778
      %v819 = vadd.f32 %v661, %v779
      %v820 = vadd.f32 %v662, %v780
      %v821 = vadd.f32 %v663, %v781
      %v822 = vadd.f32 %v664, %v782
      %v823 = vadd.f32 %v665, %v783
      %v824 = vadd.f32 %v666, %v784
      %v825 = vadd.f32 %v667, %v785
      %v826 = vadd.f32 %v668, %v786
      %v827 = vadd.f32 %v669, %v787
      %v828 = vadd.f32 %v670, %v788
      %v829 = vadd.f32 %v671, %v789
      %v830 = vadd.f32 %v672, %v790
      %v831 = vadd.f32 %v673, %v791
      %v832 = vadd.f32 %v674, %v792
      %v833 = vadd.f32 %v675, %v793
      %v834 = vadd.f32 %v676, %v794
      %v835 = vadd.f32 %v677, %v795
      %v836 = vadd.f32 %v678, %v796
      %v837 = vadd.f32 %v679, %v797
      %v838 = vadd.f32 %v680, %v798
      %v839 = vadd.f32 %v681, %v799
      %v840 = vadd.f32 %v682, %v800
      %v841 = vadd.f32 %v683, %v801
      %v842 = vadd.f32 %v684, %v802
      %v843 = vadd.f32 %v685, %v803
      %v844 = vadd.f32 %v686, %v804
      %v845 = vadd.f32 %v687, %v805
      %v846 = vadd.f32 %v688, %v806
      %v847 = vadd.f32 %v689, %v807
      %v848 = vadd.f32 %v690, %v808
      %vm849 = vcmp.eq.s32.totalorder %v375, 11
      %vm850 = vcmp.eq.s32.totalorder %v376, 11
      %vm851 = vcmp.eq.s32.totalorder %v377, 11
      %vm852 = vcmp.eq.s32.totalorder %v378, 11
      %vm853 = vcmp.eq.s32.totalorder %v379, 11
      %vm854 = vcmp.eq.s32.totalorder %v380, 11
      %vm855 = vcmp.eq.s32.totalorder %v381, 11
      %vm856 = vcmp.eq.s32.totalorder %v382, 11
      %vm857 = vcmp.eq.s32.totalorder %v383, 11
      %vm858 = vcmp.eq.s32.totalorder %v384, 11
      %vm859 = vcmp.eq.s32.totalorder %v385, 11
      %vm860 = vcmp.eq.s32.totalorder %v386, 11
      %vm861 = vcmp.eq.s32.totalorder %v387, 11
      %vm862 = vcmp.eq.s32.totalorder %v388, 11
      %vm863 = vcmp.eq.s32.totalorder %v389, 11
      %vm864 = vcmp.eq.s32.totalorder %v390, 11
      %vm865 = vcmp.eq.s32.totalorder %v391, 11
      %vm866 = vcmp.eq.s32.totalorder %v392, 11
      %vm867 = vcmp.eq.s32.totalorder %v393, 11
      %vm868 = vcmp.eq.s32.totalorder %v394, 11
      %vm869 = vcmp.eq.s32.totalorder %v395, 11
      %vm870 = vcmp.eq.s32.totalorder %v396, 11
      %vm871 = vcmp.eq.s32.totalorder %v397, 11
      %vm872 = vcmp.eq.s32.totalorder %v398, 11
      %vm873 = vcmp.eq.s32.totalorder %v399, 11
      %vm874 = vcmp.eq.s32.totalorder %v400, 11
      %vm875 = vcmp.eq.s32.totalorder %v401, 11
      %vm876 = vcmp.eq.s32.totalorder %v402, 11
      %vm877 = vcmp.eq.s32.totalorder %v403, 11
      %vm878 = vcmp.eq.s32.totalorder %v404, 11
      %vm879 = vcmp.eq.s32.totalorder %v405, 11
      %vm880 = vcmp.eq.s32.totalorder %v406, 11
      %vm881 = vcmp.eq.s32.totalorder %v407, 11
      %vm882 = vcmp.eq.s32.totalorder %v408, 11
      %vm883 = vcmp.eq.s32.totalorder %v409, 11
      %vm884 = vcmp.eq.s32.totalorder %v410, 11
      %vm885 = vcmp.eq.s32.totalorder %v411, 11
      %vm886 = vcmp.eq.s32.totalorder %v412, 11
      %vm887 = vcmp.eq.s32.totalorder %v413, 11
      %vm888 = vcmp.eq.s32.totalorder %v414, 11
      %v891 = vlaneseq
      %v892 = vshrl.u32 %v891, 7
      %v893 = vsub.s32 0, %v892
      %v894 = vrot.slane %v322, %v893
      %v895 = vlaneseq
      %v896 = vshrl.u32 %v895, 7
      %v897 = vsub.s32 4, %v896
      %v898 = vrot.slane %v322, %v897
      %v899 = vlaneseq
      %v900 = vshrl.u32 %v899, 7
      %v901 = vsub.s32 0, %v900
      %v902 = vrot.slane %v323, %v901
      %v903 = vlaneseq
      %v904 = vshrl.u32 %v903, 7
      %v905 = vsub.s32 4, %v904
      %v906 = vrot.slane %v323, %v905
      %v911 = vlaneseq
      %v912 = vshrl.u32 %v911, 7
      %v913 = vsub.s32 0, %v912
      %v914 = vrot.slane %v894, %v913
      %v915 = vlaneseq
      %v916 = vshrl.u32 %v915, 7
      %v917 = vsub.s32 0, %v916
      %v918 = vrot.slane %v898, %v917
      %v919 = vlaneseq
      %v920 = vshrl.u32 %v919, 7
      %v921 = vsub.s32 0, %v920
      %v922 = vrot.slane %v902, %v921
      %v923 = vlaneseq
      %v924 = vshrl.u32 %v923, 7
      %v925 = vsub.s32 0, %v924
      %v926 = vrot.slane %v906, %v925
      %v927 = vsel %vm849, %v914, 0.0
      %v928 = vsel %vm850, %v918, 0.0
      %v929 = vsel %vm851, %v922, 0.0
      %v930 = vsel %vm852, %v926, 0.0
      %v931 = vsel %vm853, %v914, 0.0
      %v932 = vsel %vm854, %v918, 0.0
      %v933 = vsel %vm855, %v922, 0.0
      %v934 = vsel %vm856, %v926, 0.0
      %v935 = vsel %vm857, %v914, 0.0
      %v936 = vsel %vm858, %v918, 0.0
      %v937 = vsel %vm859, %v922, 0.0
      %v938 = vsel %vm860, %v926, 0.0
      %v939 = vsel %vm861, %v914, 0.0
      %v940 = vsel %vm862, %v918, 0.0
      %v941 = vsel %vm863, %v922, 0.0
      %v942 = vsel %vm864, %v926, 0.0
      %v943 = vsel %vm865, %v914, 0.0
      %v944 = vsel %vm866, %v918, 0.0
      %v945 = vsel %vm867, %v922, 0.0
      %v946 = vsel %vm868, %v926, 0.0
      %v947 = vsel %vm869, %v914, 0.0
      %v948 = vsel %vm870, %v918, 0.0
      %v949 = vsel %vm871, %v922, 0.0
      %v950 = vsel %vm872, %v926, 0.0
      %v951 = vsel %vm873, %v914, 0.0
      %v952 = vsel %vm874, %v918, 0.0
      %v953 = vsel %vm875, %v922, 0.0
      %v954 = vsel %vm876, %v926, 0.0
      %v955 = vsel %vm877, %v914, 0.0
      %v956 = vsel %vm878, %v918, 0.0
      %v957 = vsel %vm879, %v922, 0.0
      %v958 = vsel %vm880, %v926, 0.0
      %v959 = vsel %vm881, %v914, 0.0
      %v960 = vsel %vm882, %v918, 0.0
      %v961 = vsel %vm883, %v922, 0.0
      %v962 = vsel %vm884, %v926, 0.0
      %v963 = vsel %vm885, %v914, 0.0
      %v964 = vsel %vm886, %v918, 0.0
      %v965 = vsel %vm887, %v922, 0.0
      %v966 = vsel %vm888, %v926, 0.0
      %v967 = vadd.f32 %v809, %v927
      %v968 = vadd.f32 %v810, %v928
      %v969 = vadd.f32 %v811, %v929
      %v970 = vadd.f32 %v812, %v930
      %v971 = vadd.f32 %v813, %v931
      %v972 = vadd.f32 %v814, %v932
      %v973 = vadd.f32 %v815, %v933
      %v974 = vadd.f32 %v816, %v934
      %v975 = vadd.f32 %v817, %v935
      %v976 = vadd.f32 %v818, %v936
      %v977 = vadd.f32 %v819, %v937
      %v978 = vadd.f32 %v820, %v938
      %v979 = vadd.f32 %v821, %v939
      %v980 = vadd.f32 %v822, %v940
      %v981 = vadd.f32 %v823, %v941
      %v982 = vadd.f32 %v824, %v942
      %v983 = vadd.f32 %v825, %v943
      %v984 = vadd.f32 %v826, %v944
      %v985 = vadd.f32 %v827, %v945
      %v986 = vadd.f32 %v828, %v946
      %v987 = vadd.f32 %v829, %v947
      %v988 = vadd.f32 %v830, %v948
      %v989 = vadd.f32 %v831, %v949
      %v990 = vadd.f32 %v832, %v950
      %v991 = vadd.f32 %v833, %v951
      %v992 = vadd.f32 %v834, %v952
      %v993 = vadd.f32 %v835, %v953
      %v994 = vadd.f32 %v836, %v954
      %v995 = vadd.f32 %v837, %v955
      %v996 = vadd.f32 %v838, %v956
      %v997 = vadd.f32 %v839, %v957
      %v998 = vadd.f32 %v840, %v958
      %v999 = vadd.f32 %v841, %v959
      %v1000 = vadd.f32 %v842, %v960
      %v1001 = vadd.f32 %v843, %v961
      %v1002 = vadd.f32 %v844, %v962
      %v1003 = vadd.f32 %v845, %v963
      %v1004 = vadd.f32 %v846, %v964
      %v1005 = vadd.f32 %v847, %v965
      %v1006 = vadd.f32 %v848, %v966
      %v1007 = vld [vmem:[%s209] sm:$0xff]
      %v1008 = vld [vmem:[%s209 + $0x8] sm:$0xff]
      %v1009 = vld [vmem:[%s209 + $0x10] sm:$0xff]
      %vm1010 = vcmask 654336
      %v1012 = vsel %vm1010, %v1007, 0
      %v1015 = vsel %vm1010, %v1008, 0
      %v1018 = vsel %vm1010, %v1009, 0
      %1020 = vmatprep.subr.mxu0 %v968
      %1021 = vmatpush1.msra.mxu0 %v967
      %1022 = vmatprep.subr.mxu0 %v972
      %1023 = vmatpush1.msra.mxu0 %v971
      %1024 = vmatprep.subr.mxu0 %v976
      %1025 = vmatpush1.msra.mxu0 %v975
      %1026 = vmatprep.subr.mxu0 %v980
      %1027 = vmatpush1.msra.mxu0 %v979
      %1028 = vmatprep.subr.mxu0 %v984
      %1029 = vmatpush1.msra.mxu0 %v983
      %1030 = vmatprep.subr.mxu0 %v988
      %1031 = vmatpush1.msra.mxu0 %v987
      %1032 = vmatprep.subr.mxu0 %v992
      %1033 = vmatpush1.msra.mxu0 %v991
      %1034 = vmatprep.subr.mxu0 %v996
      %1035 = vmatpush1.msra.mxu0 %v995
      %1036 = vmatprep.subr.mxu0 %v1000
      %1037 = vmatpush1.msra.mxu0 %v999
      %1038 = vmatprep.subr.mxu0 %v1004
      %1039 = vmatpush1.msra.mxu0 %v1003
      %1040 = vmatprep.subr.mxu0 0.0
      %1041 = vmatpush1.msra.mxu0 0.0
      %1042 = vmatprep.subr.mxu0 0.0
      %1043 = vmatpush1.msra.mxu0 0.0
      %1044 = vmatprep.subr.mxu0 0.0
      %1045 = vmatpush1.msra.mxu0 0.0
      %1046 = vmatprep.subr.mxu0 0.0
      %1047 = vmatpush1.msra.mxu0 0.0
      %1048 = vmatprep.subr.mxu0 0.0
      %1049 = vmatpush1.msra.mxu0 0.0
      %1050 = vmatprep.subr.mxu0 0.0
      %1051 = vmatpush1.msra.mxu0 0.0
      %1052 = vmatprep.subr.mxu0 0.0
      %1053 = vmatpush1.msra.mxu0 0.0
      %1054 = vmatprep.subr.mxu0 0.0
      %1055 = vmatpush1.msra.mxu0 0.0
      %1056 = vmatprep.subr.mxu0 0.0
      %1057 = vmatpush1.msra.mxu0 0.0
      %1058 = vmatprep.subr.mxu0 0.0
      %1059 = vmatpush1.msra.mxu0 0.0
      %1060 = vmatprep.subr.mxu0 0.0
      %1061 = vmatpush1.msra.mxu0 0.0
      %1062 = vmatprep.subr.mxu0 0.0
      %1063 = vmatpush1.msra.mxu0 0.0
      %1064 = vmatprep.subr.mxu0 0.0
      %1065 = vmatpush1.msra.mxu0 0.0
      %1066 = vmatprep.subr.mxu0 0.0
      %1067 = vmatpush1.msra.mxu0 0.0
      %1068 = vmatprep.subr.mxu0 0.0
      %1069 = vmatpush1.msra.mxu0 0.0
      %1070 = vmatprep.subr.mxu0 0.0
      %1071 = vmatpush1.msra.mxu0 0.0
      %1072 = vmatprep.subr.mxu0 0.0
      %1073 = vmatpush1.msra.mxu0 0.0
      %1074 = vmatprep.subr.mxu0 0.0
      %1075 = vmatpush1.msra.mxu0 0.0
      %1076 = vmatprep.subr.mxu0 0.0
      %1077 = vmatpush1.msra.mxu0 0.0
      %1078 = vmatprep.subr.mxu0 0.0
      %1079 = vmatpush1.msra.mxu0 0.0
      %1080 = vmatprep.subr.mxu0 0.0
      %1081 = vmatpush1.msra.mxu0 0.0
      %1082 = vmatprep.subr.mxu0 0.0
      %1083 = vmatpush1.msra.mxu0 0.0
      %1084 = vmatprep.mubr.f32.mxu0 0.0
      %1085 = vmatmul.mubr.f32.gmra.mrb[0].mxu0 %v1012
      %v1086 = vpop.f32.mrb[0].mxu0
      %v1087 = vadd.f32 0.0, %v1086
      %v1088 = vpop.f32.mrb[0].mxu0
      %v1089 = vadd.f32 0.0, %v1088
      %1090 = vmatprep.mubr.f32.mxu0 0.0
      %1091 = vmatmul.mubr.f32.gmra.mrb[0].mxu0 %v1015
      %v1092 = vpop.f32.mrb[0].mxu0
      %v1093 = vadd.f32 0.0, %v1092
      %v1094 = vpop.f32.mrb[0].mxu0
      %v1095 = vadd.f32 0.0, %v1094
      %1096 = vmatprep.mubr.f32.mxu0 0.0
      %1097 = vmatmul.mubr.f32.gmra.mrb[0].mxu0 %v1018
      %v1098 = vpop.f32.mrb[0].mxu0
      %v1099 = vadd.f32 0.0, %v1098
      %v1100 = vpop.f32.mrb[0].mxu0
      %v1101 = vadd.f32 0.0, %v1100
      %1102 = vdwg.mxu0
      %1103 = vmatprep.subr.mxu0 %v970
      %1104 = vmatpush1.msra.mxu0 %v969
      %1105 = vmatprep.subr.mxu0 %v974
      %1106 = vmatpush1.msra.mxu0 %v973
      %1107 = vmatprep.subr.mxu0 %v978
      %1108 = vmatpush1.msra.mxu0 %v977
      %1109 = vmatprep.subr.mxu0 %v982
      %1110 = vmatpush1.msra.mxu0 %v981
      %1111 = vmatprep.subr.mxu0 %v986
      %1112 = vmatpush1.msra.mxu0 %v985
      %1113 = vmatprep.subr.mxu0 %v990
      %1114 = vmatpush1.msra.mxu0 %v989
      %1115 = vmatprep.subr.mxu0 %v994
      %1116 = vmatpush1.msra.mxu0 %v993
      %1117 = vmatprep.subr.mxu0 %v998
      %1118 = vmatpush1.msra.mxu0 %v997
      %1119 = vmatprep.subr.mxu0 %v1002
      %1120 = vmatpush1.msra.mxu0 %v1001
      %1121 = vmatprep.subr.mxu0 %v1006
      %1122 = vmatpush1.msra.mxu0 %v1005
      %1123 = vmatprep.subr.mxu0 0.0
      %1124 = vmatpush1.msra.mxu0 0.0
      %1125 = vmatprep.subr.mxu0 0.0
      %1126 = vmatpush1.msra.mxu0 0.0
      %1127 = vmatprep.subr.mxu0 0.0
      %1128 = vmatpush1.msra.mxu0 0.0
      %1129 = vmatprep.subr.mxu0 0.0
      %1130 = vmatpush1.msra.mxu0 0.0
      %1131 = vmatprep.subr.mxu0 0.0
      %1132 = vmatpush1.msra.mxu0 0.0
      %1133 = vmatprep.subr.mxu0 0.0
      %1134 = vmatpush1.msra.mxu0 0.0
      %1135 = vmatprep.subr.mxu0 0.0
      %1136 = vmatpush1.msra.mxu0 0.0
      %1137 = vmatprep.subr.mxu0 0.0
      %1138 = vmatpush1.msra.mxu0 0.0
      %1139 = vmatprep.subr.mxu0 0.0
      %1140 = vmatpush1.msra.mxu0 0.0
      %1141 = vmatprep.subr.mxu0 0.0
      %1142 = vmatpush1.msra.mxu0 0.0
      %1143 = vmatprep.subr.mxu0 0.0
      %1144 = vmatpush1.msra.mxu0 0.0
      %1145 = vmatprep.subr.mxu0 0.0
      %1146 = vmatpush1.msra.mxu0 0.0
      %1147 = vmatprep.subr.mxu0 0.0
      %1148 = vmatpush1.msra.mxu0 0.0
      %1149 = vmatprep.subr.mxu0 0.0
      %1150 = vmatpush1.msra.mxu0 0.0
      %1151 = vmatprep.subr.mxu0 0.0
      %1152 = vmatpush1.msra.mxu0 0.0
      %1153 = vmatprep.subr.mxu0 0.0
      %1154 = vmatpush1.msra.mxu0 0.0
      %1155 = vmatprep.subr.mxu0 0.0
      %1156 = vmatpush1.msra.mxu0 0.0
      %1157 = vmatprep.subr.mxu0 0.0
      %1158 = vmatpush1.msra.mxu0 0.0
      %1159 = vmatprep.subr.mxu0 0.0
      %1160 = vmatpush1.msra.mxu0 0.0
      %1161 = vmatprep.subr.mxu0 0.0
      %1162 = vmatpush1.msra.mxu0 0.0
      %1163 = vmatprep.subr.mxu0 0.0
      %1164 = vmatpush1.msra.mxu0 0.0
      %1165 = vmatprep.subr.mxu0 0.0
      %1166 = vmatpush1.msra.mxu0 0.0
      %1167 = vmatprep.mubr.f32.mxu0 0.0
      %1168 = vmatmul.mubr.f32.gmra.mrb[0].mxu0 %v1012
      %v1169 = vpop.f32.mrb[0].mxu0
      %v1170 = vadd.f32 0.0, %v1169
      %v1171 = vpop.f32.mrb[0].mxu0
      %v1172 = vadd.f32 0.0, %v1171
      %1173 = vmatprep.mubr.f32.mxu0 0.0
      %1174 = vmatmul.mubr.f32.gmra.mrb[0].mxu0 %v1015
      %v1175 = vpop.f32.mrb[0].mxu0
      %v1176 = vadd.f32 0.0, %v1175
      %v1177 = vpop.f32.mrb[0].mxu0
      %v1178 = vadd.f32 0.0, %v1177
      %1179 = vmatprep.mubr.f32.mxu0 0.0
      %1180 = vmatmul.mubr.f32.gmra.mrb[0].mxu0 %v1018
      %v1181 = vpop.f32.mrb[0].mxu0
      %v1182 = vadd.f32 0.0, %v1181
      %v1183 = vpop.f32.mrb[0].mxu0
      %v1184 = vadd.f32 0.0, %v1183
      %1185 = vdwg.mxu0
      %v1186 = vld [vmem:[%s2] sm:$0xff]
      %v1187 = vld [vmem:[%s2 + $0x8] sm:$0xff]
      %v1188 = vld [vmem:[%s2 + $0x10] sm:$0xff]
      %v1189 = vsel %vm262, %v236, 0.0
      %v1190 = vsel %vm263, %v237, 0.0
      %v1191 = vsel %vm266, %v234, 0.0
      %v1192 = vsel %vm267, %v235, 0.0
      %1193 = vset.pattern.permute.xlu0 0
      %1194 = vperm.xlu0 %1193, %v1186
      %v1195 = vpop.permute.xlu0 %1194
      %1196 = vset.pattern.permute.xlu0 0
      %1197 = vperm.xlu0 %1196, %v1187
      %v1198 = vpop.permute.xlu0 %1197
      %1199 = vset.pattern.permute.xlu0 0
      %1200 = vperm.xlu0 %1199, %v1188
      %v1201 = vpop.permute.xlu0 %1200
      %v1202 = vlaneseq
      %v1203 = vshrl.u32 %v1202, 7
      %v1204 = vsub.s32 2, %v1203
      %v1205 = vrot.slane %v238, %v1204
      %v1206 = vlaneseq
      %v1207 = vshrl.u32 %v1206, 7
      %v1208 = vsub.s32 6, %v1207
      %v1209 = vrot.slane %v238, %v1208
      %v1210 = vlaneseq
      %v1211 = vshrl.u32 %v1210, 7
      %v1212 = vsub.s32 2, %v1211
      %v1213 = vrot.slane %v239, %v1212
      %v1214 = vlaneseq
      %v1215 = vshrl.u32 %v1214, 7
      %v1216 = vsub.s32 6, %v1215
      %v1217 = vrot.slane %v239, %v1216
      %v1218 = vlaneseq
      %v1219 = vshrl.u32 %v1218, 7
      %v1220 = vsub.s32 2, %v1219
      %v1221 = vrot.slane %v1205, %v1220
      %v1222 = vlaneseq
      %v1223 = vshrl.u32 %v1222, 7
      %v1224 = vsub.s32 2, %v1223
      %v1225 = vrot.slane %v1209, %v1224
      %v1226 = vlaneseq
      %v1227 = vshrl.u32 %v1226, 7
      %v1228 = vsub.s32 2, %v1227
      %v1229 = vrot.slane %v1213, %v1228
      %v1230 = vlaneseq
      %v1231 = vshrl.u32 %v1230, 7
      %v1232 = vsub.s32 2, %v1231
      %v1233 = vrot.slane %v1217, %v1232
      %vm1234 = vcmp.eq.s32.totalorder %v1195, %v1221
      %vm1235 = vcmp.eq.s32.totalorder %v1195, %v1225
      %vm1236 = vcmp.eq.s32.totalorder %v1195, %v1229
      %vm1237 = vcmp.eq.s32.totalorder %v1195, %v1233
      %vm1238 = vcmp.eq.s32.totalorder %v1198, %v1221
      %vm1239 = vcmp.eq.s32.totalorder %v1198, %v1225
      %vm1240 = vcmp.eq.s32.totalorder %v1198, %v1229
      %vm1241 = vcmp.eq.s32.totalorder %v1198, %v1233
      %vm1242 = vcmp.eq.s32.totalorder %v1201, %v1221
      %vm1243 = vcmp.eq.s32.totalorder %v1201, %v1225
      %vm1244 = vcmp.eq.s32.totalorder %v1201, %v1229
      %vm1245 = vcmp.eq.s32.totalorder %v1201, %v1233
      %v1248 = vlaneseq
      %v1249 = vshrl.u32 %v1248, 7
      %v1250 = vsub.s32 2, %v1249
      %v1251 = vrot.slane %v1189, %v1250
      %v1252 = vlaneseq
      %v1253 = vshrl.u32 %v1252, 7
      %v1254 = vsub.s32 6, %v1253
      %v1255 = vrot.slane %v1189, %v1254
      %v1256 = vlaneseq
      %v1257 = vshrl.u32 %v1256, 7
      %v1258 = vsub.s32 2, %v1257
      %v1259 = vrot.slane %v1190, %v1258
      %v1260 = vlaneseq
      %v1261 = vshrl.u32 %v1260, 7
      %v1262 = vsub.s32 6, %v1261
      %v1263 = vrot.slane %v1190, %v1262
      %v1268 = vlaneseq
      %v1269 = vshrl.u32 %v1268, 7
      %v1270 = vsub.s32 2, %v1269
      %v1271 = vrot.slane %v1251, %v1270
      %v1272 = vlaneseq
      %v1273 = vshrl.u32 %v1272, 7
      %v1274 = vsub.s32 2, %v1273
      %v1275 = vrot.slane %v1255, %v1274
      %v1276 = vlaneseq
      %v1277 = vshrl.u32 %v1276, 7
      %v1278 = vsub.s32 2, %v1277
      %v1279 = vrot.slane %v1259, %v1278
      %v1280 = vlaneseq
      %v1281 = vshrl.u32 %v1280, 7
      %v1282 = vsub.s32 2, %v1281
      %v1283 = vrot.slane %v1263, %v1282
      %v1284 = vsel %vm1234, %v1271, 0.0
      %v1285 = vsel %vm1235, %v1275, 0.0
      %v1286 = vsel %vm1236, %v1279, 0.0
      %v1287 = vsel %vm1237, %v1283, 0.0
      %v1288 = vsel %vm1238, %v1271, 0.0
      %v1289 = vsel %vm1239, %v1275, 0.0
      %v1290 = vsel %vm1240, %v1279, 0.0
      %v1291 = vsel %vm1241, %v1283, 0.0
      %v1292 = vsel %vm1242, %v1271, 0.0
      %v1293 = vsel %vm1243, %v1275, 0.0
      %v1294 = vsel %vm1244, %v1279, 0.0
      %v1295 = vsel %vm1245, %v1283, 0.0
      %v1296 = vadd.s32 %v238, 1
      %v1297 = vadd.s32 %v239, 1
      %v1298 = vlaneseq
      %v1299 = vshrl.u32 %v1298, 7
      %v1300 = vsub.s32 2, %v1299
      %v1301 = vrot.slane %v1296, %v1300
      %v1302 = vlaneseq
      %v1303 = vshrl.u32 %v1302, 7
      %v1304 = vsub.s32 6, %v1303
      %v1305 = vrot.slane %v1296, %v1304
      %v1306 = vlaneseq
      %v1307 = vshrl.u32 %v1306, 7
      %v1308 = vsub.s32 2, %v1307
      %v1309 = vrot.slane %v1297, %v1308
      %v1310 = vlaneseq
      %v1311 = vshrl.u32 %v1310, 7
      %v1312 = vsub.s32 6, %v1311
      %v1313 = vrot.slane %v1297, %v1312
      %v1314 = vlaneseq
      %v1315 = vshrl.u32 %v1314, 7
      %v1316 = vsub.s32 2, %v1315
      %v1317 = vrot.slane %v1301, %v1316
      %v1318 = vlaneseq
      %v1319 = vshrl.u32 %v1318, 7
      %v1320 = vsub.s32 2, %v1319
      %v1321 = vrot.slane %v1305, %v1320
      %v1322 = vlaneseq
      %v1323 = vshrl.u32 %v1322, 7
      %v1324 = vsub.s32 2, %v1323
      %v1325 = vrot.slane %v1309, %v1324
      %v1326 = vlaneseq
      %v1327 = vshrl.u32 %v1326, 7
      %v1328 = vsub.s32 2, %v1327
      %v1329 = vrot.slane %v1313, %v1328
      %vm1330 = vcmp.eq.s32.totalorder %v1195, %v1317
      %vm1331 = vcmp.eq.s32.totalorder %v1195, %v1321
      %vm1332 = vcmp.eq.s32.totalorder %v1195, %v1325
      %vm1333 = vcmp.eq.s32.totalorder %v1195, %v1329
      %vm1334 = vcmp.eq.s32.totalorder %v1198, %v1317
      %vm1335 = vcmp.eq.s32.totalorder %v1198, %v1321
      %vm1336 = vcmp.eq.s32.totalorder %v1198, %v1325
      %vm1337 = vcmp.eq.s32.totalorder %v1198, %v1329
      %vm1338 = vcmp.eq.s32.totalorder %v1201, %v1317
      %vm1339 = vcmp.eq.s32.totalorder %v1201, %v1321
      %vm1340 = vcmp.eq.s32.totalorder %v1201, %v1325
      %vm1341 = vcmp.eq.s32.totalorder %v1201, %v1329
      %v1344 = vlaneseq
      %v1345 = vshrl.u32 %v1344, 7
      %v1346 = vsub.s32 2, %v1345
      %v1347 = vrot.slane %v1191, %v1346
      %v1348 = vlaneseq
      %v1349 = vshrl.u32 %v1348, 7
      %v1350 = vsub.s32 6, %v1349
      %v1351 = vrot.slane %v1191, %v1350
      %v1352 = vlaneseq
      %v1353 = vshrl.u32 %v1352, 7
      %v1354 = vsub.s32 2, %v1353
      %v1355 = vrot.slane %v1192, %v1354
      %v1356 = vlaneseq
      %v1357 = vshrl.u32 %v1356, 7
      %v1358 = vsub.s32 6, %v1357
      %v1359 = vrot.slane %v1192, %v1358
      %v1364 = vlaneseq
      %v1365 = vshrl.u32 %v1364, 7
      %v1366 = vsub.s32 2, %v1365
      %v1367 = vrot.slane %v1347, %v1366
      %v1368 = vlaneseq
      %v1369 = vshrl.u32 %v1368, 7
      %v1370 = vsub.s32 2, %v1369
      %v1371 = vrot.slane %v1351, %v1370
      %v1372 = vlaneseq
      %v1373 = vshrl.u32 %v1372, 7
      %v1374 = vsub.s32 2, %v1373
      %v1375 = vrot.slane %v1355, %v1374
      %v1376 = vlaneseq
      %v1377 = vshrl.u32 %v1376, 7
      %v1378 = vsub.s32 2, %v1377
      %v1379 = vrot.slane %v1359, %v1378
      %v1380 = vsel %vm1330, %v1367, 0.0
      %v1381 = vsel %vm1331, %v1371, 0.0
      %v1382 = vsel %vm1332, %v1375, 0.0
      %v1383 = vsel %vm1333, %v1379, 0.0
      %v1384 = vsel %vm1334, %v1367, 0.0
      %v1385 = vsel %vm1335, %v1371, 0.0
      %v1386 = vsel %vm1336, %v1375, 0.0
      %v1387 = vsel %vm1337, %v1379, 0.0
      %v1388 = vsel %vm1338, %v1367, 0.0
      %v1389 = vsel %vm1339, %v1371, 0.0
      %v1390 = vsel %vm1340, %v1375, 0.0
      %v1391 = vsel %vm1341, %v1379, 0.0
      %v1392 = vadd.f32 %v1284, %v1380
      %v1393 = vadd.f32 %v1285, %v1381
      %v1394 = vadd.f32 %v1286, %v1382
      %v1395 = vadd.f32 %v1287, %v1383
      %v1396 = vadd.f32 %v1288, %v1384
      %v1397 = vadd.f32 %v1289, %v1385
      %v1398 = vadd.f32 %v1290, %v1386
      %v1399 = vadd.f32 %v1291, %v1387
      %v1400 = vadd.f32 %v1292, %v1388
      %v1401 = vadd.f32 %v1293, %v1389
      %v1402 = vadd.f32 %v1294, %v1390
      %v1403 = vadd.f32 %v1295, %v1391
      %v1404 = vlaneseq
      %v1405 = vand.u32 %v1404, 127
      %v1406 = vmul.u32 %v333, 6
      %vm1407 = vcmp.ge.s32.totalorder %v1405, %v1406
      %v1408 = vadd.s32 %v333, 1
      %v1409 = vmul.u32 %v1408, 6
      %vm1410 = vcmp.lt.s32.totalorder %v1405, %v1409
      %vm1411 = vmand %vm1407, %vm1410
      %v1412 = vsel %vm1411, 1, 0
      %v1413 = vcvt.s32.f32 %v1412
      %v1414 = vmul.f32 %v1087, %v1392
      %v1415 = vmul.f32 %v1089, %v1393
      %v1416 = vmul.f32 %v1170, %v1394
      %v1417 = vmul.f32 %v1172, %v1395
      %v1418 = vmul.f32 %v1093, %v1396
      %v1419 = vmul.f32 %v1095, %v1397
      %v1420 = vmul.f32 %v1176, %v1398
      %v1421 = vmul.f32 %v1178, %v1399
      %v1422 = vmul.f32 %v1099, %v1400
      %v1423 = vmul.f32 %v1101, %v1401
      %v1424 = vmul.f32 %v1182, %v1402
      %v1425 = vmul.f32 %v1184, %v1403
      %vm1426 = vcmask 195584
      %v1428 = vsel %vm1426, %v1413, 0
      %1430 = vmatprep.subr.mxu0 %v1415
      %1431 = vmatpush1.msra.mxu0 %v1414
      %1432 = vmatprep.subr.mxu0 %v1419
      %1433 = vmatpush1.msra.mxu0 %v1418
      %1434 = vmatprep.subr.mxu0 %v1423
      %1435 = vmatpush1.msra.mxu0 %v1422
      %1436 = vmatprep.subr.mxu0 0.0
      %1437 = vmatpush1.msra.mxu0 0.0
      %1438 = vmatprep.subr.mxu0 0.0
      %1439 = vmatpush1.msra.mxu0 0.0
      %1440 = vmatprep.subr.mxu0 0.0
      %1441 = vmatpush1.msra.mxu0 0.0
      %1442 = vmatprep.subr.mxu0 0.0
      %1443 = vmatpush1.msra.mxu0 0.0
      %1444 = vmatprep.subr.mxu0 0.0
      %1445 = vmatpush1.msra.mxu0 0.0
      %1446 = vmatprep.subr.mxu0 0.0
      %1447 = vmatpush1.msra.mxu0 0.0
      %1448 = vmatprep.subr.mxu0 0.0
      %1449 = vmatpush1.msra.mxu0 0.0
      %1450 = vmatprep.subr.mxu0 0.0
      %1451 = vmatpush1.msra.mxu0 0.0
      %1452 = vmatprep.subr.mxu0 0.0
      %1453 = vmatpush1.msra.mxu0 0.0
      %1454 = vmatprep.subr.mxu0 0.0
      %1455 = vmatpush1.msra.mxu0 0.0
      %1456 = vmatprep.subr.mxu0 0.0
      %1457 = vmatpush1.msra.mxu0 0.0
      %1458 = vmatprep.subr.mxu0 0.0
      %1459 = vmatpush1.msra.mxu0 0.0
      %1460 = vmatprep.subr.mxu0 0.0
      %1461 = vmatpush1.msra.mxu0 0.0
      %1462 = vmatprep.subr.mxu0 0.0
      %1463 = vmatpush1.msra.mxu0 0.0
      %1464 = vmatprep.subr.mxu0 0.0
      %1465 = vmatpush1.msra.mxu0 0.0
      %1466 = vmatprep.subr.mxu0 0.0
      %1467 = vmatpush1.msra.mxu0 0.0
      %1468 = vmatprep.subr.mxu0 0.0
      %1469 = vmatpush1.msra.mxu0 0.0
      %1470 = vmatprep.subr.mxu0 0.0
      %1471 = vmatpush1.msra.mxu0 0.0
      %1472 = vmatprep.subr.mxu0 0.0
      %1473 = vmatpush1.msra.mxu0 0.0
      %1474 = vmatprep.subr.mxu0 0.0
      %1475 = vmatpush1.msra.mxu0 0.0
      %1476 = vmatprep.subr.mxu0 0.0
      %1477 = vmatpush1.msra.mxu0 0.0
      %1478 = vmatprep.subr.mxu0 0.0
      %1479 = vmatpush1.msra.mxu0 0.0
      %1480 = vmatprep.subr.mxu0 0.0
      %1481 = vmatpush1.msra.mxu0 0.0
      %1482 = vmatprep.subr.mxu0 0.0
      %1483 = vmatpush1.msra.mxu0 0.0
      %1484 = vmatprep.subr.mxu0 0.0
      %1485 = vmatpush1.msra.mxu0 0.0
      %1486 = vmatprep.subr.mxu0 0.0
      %1487 = vmatpush1.msra.mxu0 0.0
      %1488 = vmatprep.subr.mxu0 0.0
      %1489 = vmatpush1.msra.mxu0 0.0
      %1490 = vmatprep.subr.mxu0 0.0
      %1491 = vmatpush1.msra.mxu0 0.0
      %1492 = vmatprep.subr.mxu0 0.0
      %1493 = vmatpush1.msra.mxu0 0.0
      %1494 = vmatprep.mubr.f32.mxu0 0.0
      %1495 = vmatmul.mubr.f32.gmra.mrb[0].mxu0 %v1428
      %v1496 = vpop.f32.mrb[0].mxu0
      %v1497 = vadd.f32 0.0, %v1496
      %v1498 = vpop.f32.mrb[0].mxu0
      %v1499 = vadd.f32 0.0, %v1498
      %1500 = vdwg.mxu0
      %1501 = vmatprep.subr.mxu0 %v1417
      %1502 = vmatpush1.msra.mxu0 %v1416
      %1503 = vmatprep.subr.mxu0 %v1421
      %1504 = vmatpush1.msra.mxu0 %v1420
      %1505 = vmatprep.subr.mxu0 %v1425
      %1506 = vmatpush1.msra.mxu0 %v1424
      %1507 = vmatprep.subr.mxu0 0.0
      %1508 = vmatpush1.msra.mxu0 0.0
      %1509 = vmatprep.subr.mxu0 0.0
      %1510 = vmatpush1.msra.mxu0 0.0
      %1511 = vmatprep.subr.mxu0 0.0
      %1512 = vmatpush1.msra.mxu0 0.0
      %1513 = vmatprep.subr.mxu0 0.0
      %1514 = vmatpush1.msra.mxu0 0.0
      %1515 = vmatprep.subr.mxu0 0.0
      %1516 = vmatpush1.msra.mxu0 0.0
      %1517 = vmatprep.subr.mxu0 0.0
      %1518 = vmatpush1.msra.mxu0 0.0
      %1519 = vmatprep.subr.mxu0 0.0
      %1520 = vmatpush1.msra.mxu0 0.0
      %1521 = vmatprep.subr.mxu0 0.0
      %1522 = vmatpush1.msra.mxu0 0.0
      %1523 = vmatprep.subr.mxu0 0.0
      %1524 = vmatpush1.msra.mxu0 0.0
      %1525 = vmatprep.subr.mxu0 0.0
      %1526 = vmatpush1.msra.mxu0 0.0
      %1527 = vmatprep.subr.mxu0 0.0
      %1528 = vmatpush1.msra.mxu0 0.0
      %1529 = vmatprep.subr.mxu0 0.0
      %1530 = vmatpush1.msra.mxu0 0.0
      %1531 = vmatprep.subr.mxu0 0.0
      %1532 = vmatpush1.msra.mxu0 0.0
      %1533 = vmatprep.subr.mxu0 0.0
      %1534 = vmatpush1.msra.mxu0 0.0
      %1535 = vmatprep.subr.mxu0 0.0
      %1536 = vmatpush1.msra.mxu0 0.0
      %1537 = vmatprep.subr.mxu0 0.0
      %1538 = vmatpush1.msra.mxu0 0.0
      %1539 = vmatprep.subr.mxu0 0.0
      %1540 = vmatpush1.msra.mxu0 0.0
      %1541 = vmatprep.subr.mxu0 0.0
      %1542 = vmatpush1.msra.mxu0 0.0
      %1543 = vmatprep.subr.mxu0 0.0
      %1544 = vmatpush1.msra.mxu0 0.0
      %1545 = vmatprep.subr.mxu0 0.0
      %1546 = vmatpush1.msra.mxu0 0.0
      %1547 = vmatprep.subr.mxu0 0.0
      %1548 = vmatpush1.msra.mxu0 0.0
      %1549 = vmatprep.subr.mxu0 0.0
      %1550 = vmatpush1.msra.mxu0 0.0
      %1551 = vmatprep.subr.mxu0 0.0
      %1552 = vmatpush1.msra.mxu0 0.0
      %1553 = vmatprep.subr.mxu0 0.0
      %1554 = vmatpush1.msra.mxu0 0.0
      %1555 = vmatprep.subr.mxu0 0.0
      %1556 = vmatpush1.msra.mxu0 0.0
      %1557 = vmatprep.subr.mxu0 0.0
      %1558 = vmatpush1.msra.mxu0 0.0
      %1559 = vmatprep.subr.mxu0 0.0
      %1560 = vmatpush1.msra.mxu0 0.0
      %1561 = vmatprep.subr.mxu0 0.0
      %1562 = vmatpush1.msra.mxu0 0.0
      %1563 = vmatprep.subr.mxu0 0.0
      %1564 = vmatpush1.msra.mxu0 0.0
      %1565 = vmatprep.mubr.f32.mxu0 0.0
      %1566 = vmatmul.mubr.f32.gmra.mrb[0].mxu0 %v1428
      %v1567 = vpop.f32.mrb[0].mxu0
      %v1568 = vadd.f32 0.0, %v1567
      %v1569 = vpop.f32.mrb[0].mxu0
      %v1570 = vadd.f32 0.0, %v1569
      %1571 = vdwg.mxu0
      %v1576 = vcombine.low %v1497, %v1499
      %v1577 = vcombine.low %v1568, %v1570
      %1580 = vst [vmem:[%s228] sm:$0xff] %v1576
      %1581 = vst [vmem:[%s228 + $0x8] sm:$0xff] %v1577
      %s1582 = smul.u32 4, %s19
      %p1583 = scmp.lt.s32.totalorder %s18, 1
      %s1584 = scalar_select %p1583, %s18, 1
      %p1585 = scmp.lt.s32.totalorder %s1582, 3
      %s1586 = scalar_select %p1585, %s1582, 3
      %s1587 = smul.addr %s1584, 4
      %s1588 = sadd.s32 %s1586, %s1587
      %s1589 = smul.addr %s1588, 4
      %s1590 = scalar_lea.vmem %s3, %s1589
      // Predicated region
      $region33: #{spatial_transformer_pallas.1} parent=31 // pred_check
        %p1591 = pneg %p121
      $region34: #{spatial_transformer_pallas.1} parent=31 // pred_check_branch
        %1593 = sbr.rel (%p1591) target = $region36
      $region35: #{spatial_transformer_pallas.1} parent=31 // pred_region
        %s1594 = smul.u32 4, %s19
      $region36: #{spatial_transformer_pallas.1} parent=31 // pred_fallthru
        _
    $region32: #{spatial_transformer_pallas.1} parent=5 // pred_fallthru
      _
    %p1595 = scmp.le.s32.totalorder 2, %s9
    // Predicated region
    $region37: #{spatial_transformer_pallas.1} parent=5 // pred_check
      %p1596 = pneg %p1595
    $region38: #{spatial_transformer_pallas.1} parent=5 // pred_check_branch
      %1598 = sbr.rel (%p1596) target = $region40
    $region39: #{spatial_transformer_pallas.1} parent=5 // pred_region
      %s1599 = ssub.s32 %s9, 2
      // Predicated region
      $region41: #{spatial_transformer_pallas.1} parent=39 // pred_check
        %p1600 = pneg %p127
      $region42: #{spatial_transformer_pallas.1} parent=39 // pred_check_branch
        %1602 = sbr.rel (%p1600) target = $region44
      $region43: #{spatial_transformer_pallas.1} parent=39 // pred_region
        %s1603 = smul.u32 4, %s21
        %p1604 = scmp.lt.s32.totalorder %s20, 1
        %s1605 = scalar_select %p1604, %s20, 1
        %p1606 = scmp.lt.s32.totalorder %s1603, 3
        %s1607 = scalar_select %p1606, %s1603, 3
        %s1608 = smul.addr %s1605, 4
        %s1609 = sadd.s32 %s1607, %s1608
        %s1610 = smul.addr %s1609, 4
        %s1611 = scalar_lea.vmem %s3, %s1610
      $region44: #{spatial_transformer_pallas.1} parent=39 // pred_fallthru
        _
    $region40: #{spatial_transformer_pallas.1} parent=5 // pred_fallthru
      _
  $region6: #{spatial_transformer_pallas.1} parent=0 // loop_footer
    %s13 = sadd.s32 1, %s9
  $region7: #{spatial_transformer_pallas.1} parent=0 // loop_footer_branch
    %8 = sbr.rel target = $region3
  $region8: #{spatial_transformer_pallas.1} parent=0 // loop_exit
    _

</llo_original>
